<compile_context>
chip_gen: v7x
topology: tpu7x:2x2x1
jax: 0.10.0
libtpu: 0.0.40
codegen_flags: <defaults>
</compile_context>

<pallas_src>
import jax
import jax.numpy as jnp
from jax.experimental import pallas as pl
from jax.experimental.pallas import tpu as pltpu


def lstm_kernel(x_ref, wih_ref, whh_ref, b_ref, h_out_ref,
                xproj_ref, h_ref, c_ref):
    # x_ref:     (T, Bt, I)     time-major batch tile of the input (f32)
    # wih_ref:   (I, 4*Hp)      W_ih^T, gate-blocked & lane-padded (matmul dtype)
    # whh_ref:   (Hp, 4*Hp)     W_hh^T, gate-blocked & lane-padded (matmul dtype)
    # b_ref:     (1, 4*Hp)      b_ih + b_hh, gate-blocked & lane-padded (f32)
    # h_out_ref: (Bt, Hp)       final hidden state (f32, lane-dense)
    # xproj_ref: (T, Bt, 4*Hp)  scratch: hoisted input projection (f32)
    # h_ref/c_ref: (Bt, Hp)     scratch: recurrent state (f32)
    seq_len, bt, in_dim = x_ref.shape
    hp = whh_ref.shape[0]
    mx_dtype = whh_ref.dtype            # MXU input dtype (bf16 default, or f32)

    wih = wih_ref[...]
    whh = whh_ref[...]
    bias = b_ref[...]                   # f32

    # ---- Hoisted input projection: one big MXU matmul over all time steps ----
    # (T, Bt, I) -> (T*Bt, I) merges the major axis over an already-(Bt, I)
    # tiled layout (Bt % 8 == 0), so both reshapes here are relabels (no copy).
    x2d = x_ref[...].reshape(seq_len * bt, in_dim).astype(mx_dtype)
    xproj = jnp.dot(x2d, wih, preferred_element_type=jnp.float32) + bias
    xproj_ref[...] = xproj.reshape(seq_len, bt, 4 * hp)      # time-major slabs

    h_ref[...] = jnp.zeros_like(h_ref)
    c_ref[...] = jnp.zeros_like(c_ref)

    def step(t):
        # Only per-step MXU work on the serial chain: (Bt, Hp) @ (Hp, 4*Hp).
        gates = xproj_ref[t] + jnp.dot(h_ref[...].astype(mx_dtype), whh,
                                       preferred_element_type=jnp.float32)
        # Packed gate order (i, f, o, g): one sigmoid over 3 lane-aligned gate
        # blocks + one tanh -> fewer EUP launches per step.
        sig = jax.nn.sigmoid(gates[:, :3 * hp])
        i_g = sig[:, 0 * hp:1 * hp]
        f_g = sig[:, 1 * hp:2 * hp]
        o_g = sig[:, 2 * hp:3 * hp]
        g_g = jnp.tanh(gates[:, 3 * hp:])
        # Cell/hidden updates stay in f32 (VPU/EUP), written back to scratch.
        c_new = f_g * c_ref[...] + i_g * g_g
        c_ref[...] = c_new
        h_ref[...] = o_g * jnp.tanh(c_new)

    if seq_len <= 32:
        # Small static T: full unroll -> static slices, LLO scheduling visibility.
        for t in range(seq_len):
            step(t)
    else:
        # Long T: bounded-unroll loop keeps code size / vreg pressure constant.
        def body(t, carry):
            step(t)
            return carry
        jax.lax.fori_loop(0, seq_len, body, 0, unroll=8)

    h_out_ref[...] = h_ref[...]


def _round_up(n, m):
    return ((n + m - 1) // m) * m


# PyTorch stacks LSTM gates as (i, f, g, o); we repack as (i, f, o, g) so the
# three sigmoid gates are one contiguous 3*Hp-lane slab.
_PACKED_GATE_ORDER = (0, 1, 3, 2)


def _pack_gate_matrix(w, hidden, hidden_pad):
    """(4H, K) torch gate-stacked weight -> (K, 4*Hp), gates (i,f,o,g), lane-padded."""
    cols = []
    for g in _PACKED_GATE_ORDER:
        wg = w[g * hidden:(g + 1) * hidden, :].T                    # (K, H)
        cols.append(jnp.pad(wg, ((0, 0), (0, hidden_pad - hidden))))
    return jnp.concatenate(cols, axis=1)                            # (K, 4*Hp)


def _pack_gate_bias(b, hidden, hidden_pad):
    cols = [jnp.pad(b[g * hidden:(g + 1) * hidden], (0, hidden_pad - hidden))
            for g in _PACKED_GATE_ORDER]
    return jnp.concatenate(cols).reshape(1, 4 * hidden_pad)         # (1, 4*Hp)


def _choose_batch_tiling(batch, b_tile_max):
    """Pick (b_tile, Bp): fill the MXU M dim, but keep >= 2 grid steps whenever
    the batch allows it so the 'parallel' axis can use both v7x TensorCores."""
    bp = _round_up(max(batch, 1), 8)
    b_tile = min(_round_up(b_tile_max, 8), bp)
    if bp > 8 and bp // b_tile < 2:
        b_tile = max(8, _round_up(pl.cdiv(bp, 2), 8))
    bp = _round_up(bp, b_tile)
    return b_tile, bp


def shallow_regression_lstm(x, params, *, b_tile_max=256,
                            matmul_dtype=jnp.bfloat16):
    """x: (B, T, input_size) float32. Returns (B,) float32."""
    B, T, I = x.shape
    H = params["w_hh"].shape[1]       # w_hh: (4H, H)
    Hp = _round_up(H, 128)            # each gate gets its own 128-lane block
    # NOTE: at H << 128 most gate lanes are padding; for production H <= 32 a
    # contiguous 4H-lane layout + pltpu.roll alignment would waste less MXU/EUP
    # work, but per-gate 128-lane blocks are the right design for H >= 128.

    # Weight re-pack (weight-sized; stash these once if calling repeatedly).
    # Padded lanes carry zero weight & zero bias, so padded h/c stay exactly 0.
    wih_p = _pack_gate_matrix(params["w_ih"], H, Hp).astype(matmul_dtype)   # (I, 4Hp)
    whh_p = _pack_gate_matrix(params["w_hh"], H, Hp)                        # (H, 4Hp)
    whh_p = jnp.pad(whh_p, ((0, Hp - H), (0, 0))).astype(matmul_dtype)      # (Hp, 4Hp)
    bias_p = _pack_gate_bias(params["b_ih"] + params["b_hh"], H, Hp)        # (1, 4Hp)

    # Batch tiling: big tiles (up to 256) fill the MXU M dimension; pad batch.
    b_tile, Bp = _choose_batch_tiling(B, b_tile_max)
    x_pad = jnp.pad(x, ((0, Bp - B), (0, 0), (0, 0))) if Bp != B else x
    # Time-major layout so in-kernel reshapes are relabels and per-step reads
    # are contiguous sublane-aligned slabs (one cheap XLA transpose, outside
    # the kernel; x is read exactly once by the kernel afterwards).
    x_tm = jnp.transpose(x_pad, (1, 0, 2))                                  # (T, Bp, I)

    h_final = pl.pallas_call(
        lstm_kernel,
        out_shape=jax.ShapeDtypeStruct((Bp, Hp), jnp.float32),
        grid_spec=pltpu.PrefetchScalarGridSpec(
            num_scalar_prefetch=0,
            grid=(Bp // b_tile,),
            in_specs=[
                # x tiles stream HBM->VMEM per batch tile (auto double-buffered);
                # weights/bias keep a constant block index -> stay resident.
                pl.BlockSpec((T, b_tile, I), lambda b: (0, b, 0)),
                pl.BlockSpec((I, 4 * Hp), lambda b: (0, 0)),
                pl.BlockSpec((Hp, 4 * Hp), lambda b: (0, 0)),
                pl.BlockSpec((1, 4 * Hp), lambda b: (0, 0)),
            ],
            out_specs=pl.BlockSpec((b_tile, Hp), lambda b: (b, 0)),
            scratch_shapes=[
                pltpu.VMEM((T, b_tile, 4 * Hp), jnp.float32),   # xproj
                pltpu.VMEM((b_tile, Hp), jnp.float32),          # h
                pltpu.VMEM((b_tile, Hp), jnp.float32),          # c
            ],
        ),
        compiler_params=pltpu.CompilerParams(
            # Batch tiles are independent -> parallel axis (megacore on v7x).
            dimension_semantics=("parallel",),
            # At b_tile=256, T=8, Hp=128 the per-tile footprint is ~5 MiB
            # (xproj scratch dominates at 4 MiB) -> fits 32 MiB with headroom
            # on v5e/v6e/v7x alike.
            vmem_limit_bytes=32 * 1024 * 1024,
        ),
    )(x_tm, wih_p, whh_p, bias_p)

    # Final 1-wide Linear kept in XLA so the kernel output stays lane-dense.
    h_T = h_final[:B, :H]                                  # (B, H)
    out = h_T @ params["w_out"].T + params["b_out"]        # (B, 1)
    return out.reshape(-1)


def reference_forward(x, params):
    """Pure-JAX reference matching nn.LSTM + nn.Linear semantics."""
    B, T, I = x.shape
    H = params["w_hh"].shape[1]
    h = jnp.zeros((B, H), jnp.float32)
    c = jnp.zeros((B, H), jnp.float32)
    for t in range(T):
        g = x[:, t, :] @ params["w_ih"].T + h @ params["w_hh"].T \
            + params["b_ih"] + params["b_hh"]
        i_g = jax.nn.sigmoid(g[:, 0:H])
        f_g = jax.nn.sigmoid(g[:, H:2 * H])
        g_g = jnp.tanh(g[:, 2 * H:3 * H])
        o_g = jax.nn.sigmoid(g[:, 3 * H:4 * H])
        c = f_g * c + i_g * g_g
        h = o_g * jnp.tanh(c)
    return (h @ params["w_out"].T + params["b_out"]).reshape(-1)


def init_params(key, input_size, hidden_size):
    """Deterministic init, PyTorch-style uniform(-1/sqrt(H), 1/sqrt(H))."""
    ks = jax.random.split(key, 6)
    bound = 1.0 / jnp.sqrt(jnp.float32(hidden_size))
    u = lambda k, shape: jax.random.uniform(
        k, shape, jnp.float32, minval=-bound, maxval=bound)
    return {
        "w_ih": u(ks[0], (4 * hidden_size, input_size)),
        "w_hh": u(ks[1], (4 * hidden_size, hidden_size)),
        "b_ih": u(ks[2], (4 * hidden_size,)),
        "b_hh": u(ks[3], (4 * hidden_size,)),
        "w_out": u(ks[4], (1, hidden_size)),
        "b_out": u(ks[5], (1,)),
    }


if __name__ == "__main__":
    B, T, INPUT, HIDDEN = 2, 8, 4, 32
    key = jax.random.PRNGKey(0)
    k_x, k_p, k_x2 = jax.random.split(key, 3)
    x = jax.random.normal(k_x, (B, T, INPUT), dtype=jnp.float32)
    params = init_params(k_p, INPUT, HIDDEN)

    ref = reference_forward(x, params)

    # Exact-precision path (f32 MXU inputs): numerically matches the reference.
    out_f32 = jax.block_until_ready(
        shallow_regression_lstm(x, params, matmul_dtype=jnp.float32))
    assert out_f32.shape == (B,), out_f32.shape
    assert jnp.allclose(out_f32, ref, atol=1e-4, rtol=1e-4), (out_f32, ref)

    # Default path: bf16 MXU inputs (v5e/v6e/v7x recommendation), f32
    # accumulation + f32 activations/cell state -> small drift vs f32 reference.
    out = jax.block_until_ready(shallow_regression_lstm(x, params))
    assert out.shape == (B,), out.shape
    assert jnp.allclose(out, ref, atol=5e-2, rtol=5e-2), (out, ref)

    # Multi-tile path (padded batch, 2 grid steps) to exercise the batch grid.
    B2 = 20
    x2 = jax.random.normal(k_x2, (B2, T, INPUT), dtype=jnp.float32)
    ref2 = reference_forward(x2, params)
    out2 = jax.block_until_ready(
        shallow_regression_lstm(x2, params, b_tile_max=16,
                                matmul_dtype=jnp.float32))
    assert out2.shape == (B2,), out2.shape
    assert jnp.allclose(out2, ref2, atol=1e-4, rtol=1e-4), (out2, ref2)

    print("KERNEL_OK")
</pallas_src>

<mosaic_0001>
module attributes {stable_mosaic.version = 11 : i64} {
  func.func @lstm_kernel(%arg0: i32, %arg1: memref<8x8x4xf32, #tpu.memory_space<vmem>>, %arg2: memref<4x512xf32, #tpu.memory_space<vmem>>, %arg3: memref<128x512xf32, #tpu.memory_space<vmem>>, %arg4: memref<1x512xf32, #tpu.memory_space<vmem>>, %arg5: memref<8x128xf32, #tpu.memory_space<vmem>>, %arg6: memref<8x8x512xf32, #tpu.memory_space<vmem>>, %arg7: memref<8x128xf32, #tpu.memory_space<vmem>>, %arg8: memref<8x128xf32, #tpu.memory_space<vmem>>) attributes {dimension_semantics = [#tpu.dimension_semantics<parallel>], iteration_bounds = array<i64: 1>, scalar_prefetch = 0 : i64, scratch_operands = 3 : i64, tpu.core_type = #tpu.core_type<tc>, window_params = [{transform_indices = @transform_0, window_bounds = array<i64: 8, 8, 4>}, {pipeline_mode = #tpu.pipeline_mode<synchronous>, transform_indices = @transform_1, window_bounds = array<i64: 4, 512>}, {pipeline_mode = #tpu.pipeline_mode<synchronous>, transform_indices = @transform_2, window_bounds = array<i64: 128, 512>}, {pipeline_mode = #tpu.pipeline_mode<synchronous>, transform_indices = @transform_3, window_bounds = array<i64: 1, 512>}, {transform_indices = @transform_4, window_bounds = array<i64: 8, 128>}]} {
    %c0 = arith.constant 0 : index
    %c0_0 = arith.constant 0 : index
    %0 = vector.load %arg2[%c0, %c0_0] : memref<4x512xf32, #tpu.memory_space<vmem>>, vector<4x512xf32>
    %c0_1 = arith.constant 0 : index
    %c0_2 = arith.constant 0 : index
    %1 = vector.load %arg3[%c0_1, %c0_2] : memref<128x512xf32, #tpu.memory_space<vmem>>, vector<128x512xf32>
    %c0_3 = arith.constant 0 : index
    %c0_4 = arith.constant 0 : index
    %2 = vector.load %arg4[%c0_3, %c0_4] : memref<1x512xf32, #tpu.memory_space<vmem>>, vector<1x512xf32>
    %c0_5 = arith.constant 0 : index
    %c0_6 = arith.constant 0 : index
    %c0_7 = arith.constant 0 : index
    %3 = vector.load %arg1[%c0_5, %c0_6, %c0_7] : memref<8x8x4xf32, #tpu.memory_space<vmem>>, vector<8x8x4xf32>
    %4 = vector.shape_cast %3 : vector<8x8x4xf32> to vector<64x4xf32>
    %cst = arith.constant dense<0.000000e+00> : vector<64x512xf32>
    %5 = tpu.matmul %4, %0, %cst {dimension_numbers = #tpu.dot_dimension_numbers<[1], [0], [0], [1], [0, 0, 1, 1], [], []>} : vector<64x4xf32>, vector<4x512xf32>, vector<64x512xf32> -> vector<64x512xf32>
    %6 = vector.broadcast %2 : vector<1x512xf32> to vector<64x512xf32>
    %7 = arith.addf %5, %6 : vector<64x512xf32>
    %8 = vector.shape_cast %7 : vector<64x512xf32> to vector<8x8x512xf32>
    %c0_8 = arith.constant 0 : index
    %c0_9 = arith.constant 0 : index
    %c0_10 = arith.constant 0 : index
    %9 = vector.load %arg6[%c0_8, %c0_9, %c0_10] : memref<8x8x512xf32, #tpu.memory_space<vmem>>, vector<8x8x512xf32>
    tpu.vector_store %arg6[%c0_8, %c0_9, %c0_10], %8 {strides = array<i32>} : memref<8x8x512xf32, #tpu.memory_space<vmem>>, vector<8x8x512xf32>,
    %cst_11 = arith.constant 0.000000e+00 : f32
    %10 = vector.broadcast %cst_11 : f32 to vector<8x128xf32>
    %c0_12 = arith.constant 0 : index
    %c0_13 = arith.constant 0 : index
    %11 = vector.load %arg7[%c0_12, %c0_13] : memref<8x128xf32, #tpu.memory_space<vmem>>, vector<8x128xf32>
    tpu.vector_store %arg7[%c0_12, %c0_13], %10 {strides = array<i32>} : memref<8x128xf32, #tpu.memory_space<vmem>>, vector<8x128xf32>,
    %cst_14 = arith.constant 0.000000e+00 : f32
    %12 = vector.broadcast %cst_14 : f32 to vector<8x128xf32>
    %c0_15 = arith.constant 0 : index
    %c0_16 = arith.constant 0 : index
    %13 = vector.load %arg8[%c0_15, %c0_16] : memref<8x128xf32, #tpu.memory_space<vmem>>, vector<8x128xf32>
    tpu.vector_store %arg8[%c0_15, %c0_16], %12 {strides = array<i32>} : memref<8x128xf32, #tpu.memory_space<vmem>>, vector<8x128xf32>,
    %c0_17 = arith.constant 0 : index
    %c0_18 = arith.constant 0 : index
    %c0_19 = arith.constant 0 : index
    %14 = vector.load %arg6[%c0_17, %c0_18, %c0_19] : memref<8x8x512xf32, #tpu.memory_space<vmem>>, vector<1x8x512xf32>
    %15 = vector.shape_cast %14 : vector<1x8x512xf32> to vector<8x512xf32>
    %c0_20 = arith.constant 0 : index
    %c0_21 = arith.constant 0 : index
    %16 = vector.load %arg7[%c0_20, %c0_21] : memref<8x128xf32, #tpu.memory_space<vmem>>, vector<8x128xf32>
    %cst_22 = arith.constant dense<0.000000e+00> : vector<8x512xf32>
    %17 = tpu.matmul %16, %1, %cst_22 {dimension_numbers = #tpu.dot_dimension_numbers<[1], [0], [0], [1], [0, 0, 1, 1], [], []>} : vector<8x128xf32>, vector<128x512xf32>, vector<8x512xf32> -> vector<8x512xf32>
    %18 = arith.addf %15, %17 : vector<8x512xf32>
    %19 = vector.extract_strided_slice %18 {offsets = [0, 0], sizes = [8, 384], strides = [1, 1]} : vector<8x512xf32> to vector<8x384xf32>
    %20 = arith.negf %19 : vector<8x384xf32>
    %21 = math.exp %20 : vector<8x384xf32>
    %cst_23 = arith.constant 1.000000e+00 : f32
    %22 = vector.broadcast %cst_23 : f32 to vector<8x384xf32>
    %23 = arith.addf %22, %21 : vector<8x384xf32>
    %24 = arith.divf %22, %23 : vector<8x384xf32>
    %25 = vector.extract_strided_slice %24 {offsets = [0, 0], sizes = [8, 128], strides = [1, 1]} : vector<8x384xf32> to vector<8x128xf32>
    %26 = vector.extract_strided_slice %24 {offsets = [0, 128], sizes = [8, 128], strides = [1, 1]} : vector<8x384xf32> to vector<8x128xf32>
    %27 = vector.extract_strided_slice %24 {offsets = [0, 256], sizes = [8, 128], strides = [1, 1]} : vector<8x384xf32> to vector<8x128xf32>
    %28 = vector.extract_strided_slice %18 {offsets = [0, 384], sizes = [8, 128], strides = [1, 1]} : vector<8x512xf32> to vector<8x128xf32>
    %29 = math.tanh %28 : vector<8x128xf32>
    %c0_24 = arith.constant 0 : index
    %c0_25 = arith.constant 0 : index
    %30 = vector.load %arg8[%c0_24, %c0_25] : memref<8x128xf32, #tpu.memory_space<vmem>>, vector<8x128xf32>
    %31 = arith.mulf %26, %30 : vector<8x128xf32>
    %32 = arith.mulf %25, %29 : vector<8x128xf32>
    %33 = arith.addf %31, %32 : vector<8x128xf32>
    %c0_26 = arith.constant 0 : index
    %c0_27 = arith.constant 0 : index
    %34 = vector.load %arg8[%c0_26, %c0_27] : memref<8x128xf32, #tpu.memory_space<vmem>>, vector<8x128xf32>
    tpu.vector_store %arg8[%c0_26, %c0_27], %33 {strides = array<i32>} : memref<8x128xf32, #tpu.memory_space<vmem>>, vector<8x128xf32>,
    %35 = math.tanh %33 : vector<8x128xf32>
    %36 = arith.mulf %27, %35 : vector<8x128xf32>
    %c0_28 = arith.constant 0 : index
    %c0_29 = arith.constant 0 : index
    %37 = vector.load %arg7[%c0_28, %c0_29] : memref<8x128xf32, #tpu.memory_space<vmem>>, vector<8x128xf32>
    tpu.vector_store %arg7[%c0_28, %c0_29], %36 {strides = array<i32>} : memref<8x128xf32, #tpu.memory_space<vmem>>, vector<8x128xf32>,
    %c1 = arith.constant 1 : index
    %c0_30 = arith.constant 0 : index
    %c0_31 = arith.constant 0 : index
    %38 = vector.load %arg6[%c1, %c0_30, %c0_31] : memref<8x8x512xf32, #tpu.memory_space<vmem>>, vector<1x8x512xf32>
    %39 = vector.shape_cast %38 : vector<1x8x512xf32> to vector<8x512xf32>
    %c0_32 = arith.constant 0 : index
    %c0_33 = arith.constant 0 : index
    %40 = vector.load %arg7[%c0_32, %c0_33] : memref<8x128xf32, #tpu.memory_space<vmem>>, vector<8x128xf32>
    %cst_34 = arith.constant dense<0.000000e+00> : vector<8x512xf32>
    %41 = tpu.matmul %40, %1, %cst_34 {dimension_numbers = #tpu.dot_dimension_numbers<[1], [0], [0], [1], [0, 0, 1, 1], [], []>} : vector<8x128xf32>, vector<128x512xf32>, vector<8x512xf32> -> vector<8x512xf32>
    %42 = arith.addf %39, %41 : vector<8x512xf32>
    %43 = vector.extract_strided_slice %42 {offsets = [0, 0], sizes = [8, 384], strides = [1, 1]} : vector<8x512xf32> to vector<8x384xf32>
    %44 = arith.negf %43 : vector<8x384xf32>
    %45 = math.exp %44 : vector<8x384xf32>
    %cst_35 = arith.constant 1.000000e+00 : f32
    %46 = vector.broadcast %cst_35 : f32 to vector<8x384xf32>
    %47 = arith.addf %46, %45 : vector<8x384xf32>
    %48 = arith.divf %46, %47 : vector<8x384xf32>
    %49 = vector.extract_strided_slice %48 {offsets = [0, 0], sizes = [8, 128], strides = [1, 1]} : vector<8x384xf32> to vector<8x128xf32>
    %50 = vector.extract_strided_slice %48 {offsets = [0, 128], sizes = [8, 128], strides = [1, 1]} : vector<8x384xf32> to vector<8x128xf32>
    %51 = vector.extract_strided_slice %48 {offsets = [0, 256], sizes = [8, 128], strides = [1, 1]} : vector<8x384xf32> to vector<8x128xf32>
    %52 = vector.extract_strided_slice %42 {offsets = [0, 384], sizes = [8, 128], strides = [1, 1]} : vector<8x512xf32> to vector<8x128xf32>
    %53 = math.tanh %52 : vector<8x128xf32>
    %c0_36 = arith.constant 0 : index
    %c0_37 = arith.constant 0 : index
    %54 = vector.load %arg8[%c0_36, %c0_37] : memref<8x128xf32, #tpu.memory_space<vmem>>, vector<8x128xf32>
    %55 = arith.mulf %50, %54 : vector<8x128xf32>
    %56 = arith.mulf %49, %53 : vector<8x128xf32>
    %57 = arith.addf %55, %56 : vector<8x128xf32>
    %c0_38 = arith.constant 0 : index
    %c0_39 = arith.constant 0 : index
    %58 = vector.load %arg8[%c0_38, %c0_39] : memref<8x128xf32, #tpu.memory_space<vmem>>, vector<8x128xf32>
    tpu.vector_store %arg8[%c0_38, %c0_39], %57 {strides = array<i32>} : memref<8x128xf32, #tpu.memory_space<vmem>>, vector<8x128xf32>,
    %59 = math.tanh %57 : vector<8x128xf32>
    %60 = arith.mulf %51, %59 : vector<8x128xf32>
    %c0_40 = arith.constant 0 : index
    %c0_41 = arith.constant 0 : index
    %61 = vector.load %arg7[%c0_40, %c0_41] : memref<8x128xf32, #tpu.memory_space<vmem>>, vector<8x128xf32>
    tpu.vector_store %arg7[%c0_40, %c0_41], %60 {strides = array<i32>} : memref<8x128xf32, #tpu.memory_space<vmem>>, vector<8x128xf32>,
    %c2 = arith.constant 2 : index
    %c0_42 = arith.constant 0 : index
    %c0_43 = arith.constant 0 : index
    %62 = vector.load %arg6[%c2, %c0_42, %c0_43] : memref<8x8x512xf32, #tpu.memory_space<vmem>>, vector<1x8x512xf32>
    %63 = vector.shape_cast %62 : vector<1x8x512xf32> to vector<8x512xf32>
    %c0_44 = arith.constant 0 : index
    %c0_45 = arith.constant 0 : index
    %64 = vector.load %arg7[%c0_44, %c0_45] : memref<8x128xf32, #tpu.memory_space<vmem>>, vector<8x128xf32>
    %cst_46 = arith.constant dense<0.000000e+00> : vector<8x512xf32>
    %65 = tpu.matmul %64, %1, %cst_46 {dimension_numbers = #tpu.dot_dimension_numbers<[1], [0], [0], [1], [0, 0, 1, 1], [], []>} : vector<8x128xf32>, vector<128x512xf32>, vector<8x512xf32> -> vector<8x512xf32>
    %66 = arith.addf %63, %65 : vector<8x512xf32>
    %67 = vector.extract_strided_slice %66 {offsets = [0, 0], sizes = [8, 384], strides = [1, 1]} : vector<8x512xf32> to vector<8x384xf32>
    %68 = arith.negf %67 : vector<8x384xf32>
    %69 = math.exp %68 : vector<8x384xf32>
    %cst_47 = arith.constant 1.000000e+00 : f32
    %70 = vector.broadcast %cst_47 : f32 to vector<8x384xf32>
    %71 = arith.addf %70, %69 : vector<8x384xf32>
    %72 = arith.divf %70, %71 : vector<8x384xf32>
    %73 = vector.extract_strided_slice %72 {offsets = [0, 0], sizes = [8, 128], strides = [1, 1]} : vector<8x384xf32> to vector<8x128xf32>
    %74 = vector.extract_strided_slice %72 {offsets = [0, 128], sizes = [8, 128], strides = [1, 1]} : vector<8x384xf32> to vector<8x128xf32>
    %75 = vector.extract_strided_slice %72 {offsets = [0, 256], sizes = [8, 128], strides = [1, 1]} : vector<8x384xf32> to vector<8x128xf32>
    %76 = vector.extract_strided_slice %66 {offsets = [0, 384], sizes = [8, 128], strides = [1, 1]} : vector<8x512xf32> to vector<8x128xf32>
    %77 = math.tanh %76 : vector<8x128xf32>
    %c0_48 = arith.constant 0 : index
    %c0_49 = arith.constant 0 : index
    %78 = vector.load %arg8[%c0_48, %c0_49] : memref<8x128xf32, #tpu.memory_space<vmem>>, vector<8x128xf32>
    %79 = arith.mulf %74, %78 : vector<8x128xf32>
    %80 = arith.mulf %73, %77 : vector<8x128xf32>
    %81 = arith.addf %79, %80 : vector<8x128xf32>
    %c0_50 = arith.constant 0 : index
    %c0_51 = arith.constant 0 : index
    %82 = vector.load %arg8[%c0_50, %c0_51] : memref<8x128xf32, #tpu.memory_space<vmem>>, vector<8x128xf32>
    tpu.vector_store %arg8[%c0_50, %c0_51], %81 {strides = array<i32>} : memref<8x128xf32, #tpu.memory_space<vmem>>, vector<8x128xf32>,
    %83 = math.tanh %81 : vector<8x128xf32>
    %84 = arith.mulf %75, %83 : vector<8x128xf32>
    %c0_52 = arith.constant 0 : index
    %c0_53 = arith.constant 0 : index
    %85 = vector.load %arg7[%c0_52, %c0_53] : memref<8x128xf32, #tpu.memory_space<vmem>>, vector<8x128xf32>
    tpu.vector_store %arg7[%c0_52, %c0_53], %84 {strides = array<i32>} : memref<8x128xf32, #tpu.memory_space<vmem>>, vector<8x128xf32>,
    %c3 = arith.constant 3 : index
    %c0_54 = arith.constant 0 : index
    %c0_55 = arith.constant 0 : index
    %86 = vector.load %arg6[%c3, %c0_54, %c0_55] : memref<8x8x512xf32, #tpu.memory_space<vmem>>, vector<1x8x512xf32>
    %87 = vector.shape_cast %86 : vector<1x8x512xf32> to vector<8x512xf32>
    %c0_56 = arith.constant 0 : index
    %c0_57 = arith.constant 0 : index
    %88 = vector.load %arg7[%c0_56, %c0_57] : memref<8x128xf32, #tpu.memory_space<vmem>>, vector<8x128xf32>
    %cst_58 = arith.constant dense<0.000000e+00> : vector<8x512xf32>
    %89 = tpu.matmul %88, %1, %cst_58 {dimension_numbers = #tpu.dot_dimension_numbers<[1], [0], [0], [1], [0, 0, 1, 1], [], []>} : vector<8x128xf32>, vector<128x512xf32>, vector<8x512xf32> -> vector<8x512xf32>
    %90 = arith.addf %87, %89 : vector<8x512xf32>
    %91 = vector.extract_strided_slice %90 {offsets = [0, 0], sizes = [8, 384], strides = [1, 1]} : vector<8x512xf32> to vector<8x384xf32>
    %92 = arith.negf %91 : vector<8x384xf32>
    %93 = math.exp %92 : vector<8x384xf32>
    %cst_59 = arith.constant 1.000000e+00 : f32
    %94 = vector.broadcast %cst_59 : f32 to vector<8x384xf32>
    %95 = arith.addf %94, %93 : vector<8x384xf32>
    %96 = arith.divf %94, %95 : vector<8x384xf32>
    %97 = vector.extract_strided_slice %96 {offsets = [0, 0], sizes = [8, 128], strides = [1, 1]} : vector<8x384xf32> to vector<8x128xf32>
    %98 = vector.extract_strided_slice %96 {offsets = [0, 128], sizes = [8, 128], strides = [1, 1]} : vector<8x384xf32> to vector<8x128xf32>
    %99 = vector.extract_strided_slice %96 {offsets = [0, 256], sizes = [8, 128], strides = [1, 1]} : vector<8x384xf32> to vector<8x128xf32>
    %100 = vector.extract_strided_slice %90 {offsets = [0, 384], sizes = [8, 128], strides = [1, 1]} : vector<8x512xf32> to vector<8x128xf32>
    %101 = math.tanh %100 : vector<8x128xf32>
    %c0_60 = arith.constant 0 : index
    %c0_61 = arith.constant 0 : index
    %102 = vector.load %arg8[%c0_60, %c0_61] : memref<8x128xf32, #tpu.memory_space<vmem>>, vector<8x128xf32>
    %103 = arith.mulf %98, %102 : vector<8x128xf32>
    %104 = arith.mulf %97, %101 : vector<8x128xf32>
    %105 = arith.addf %103, %104 : vector<8x128xf32>
    %c0_62 = arith.constant 0 : index
    %c0_63 = arith.constant 0 : index
    %106 = vector.load %arg8[%c0_62, %c0_63] : memref<8x128xf32, #tpu.memory_space<vmem>>, vector<8x128xf32>
    tpu.vector_store %arg8[%c0_62, %c0_63], %105 {strides = array<i32>} : memref<8x128xf32, #tpu.memory_space<vmem>>, vector<8x128xf32>,
    %107 = math.tanh %105 : vector<8x128xf32>
    %108 = arith.mulf %99, %107 : vector<8x128xf32>
    %c0_64 = arith.constant 0 : index
    %c0_65 = arith.constant 0 : index
    %109 = vector.load %arg7[%c0_64, %c0_65] : memref<8x128xf32, #tpu.memory_space<vmem>>, vector<8x128xf32>
    tpu.vector_store %arg7[%c0_64, %c0_65], %108 {strides = array<i32>} : memref<8x128xf32, #tpu.memory_space<vmem>>, vector<8x128xf32>,
    %c4 = arith.constant 4 : index
    %c0_66 = arith.constant 0 : index
    %c0_67 = arith.constant 0 : index
    %110 = vector.load %arg6[%c4, %c0_66, %c0_67] : memref<8x8x512xf32, #tpu.memory_space<vmem>>, vector<1x8x512xf32>
    %111 = vector.shape_cast %110 : vector<1x8x512xf32> to vector<8x512xf32>
    %c0_68 = arith.constant 0 : index
    %c0_69 = arith.constant 0 : index
    %112 = vector.load %arg7[%c0_68, %c0_69] : memref<8x128xf32, #tpu.memory_space<vmem>>, vector<8x128xf32>
    %cst_70 = arith.constant dense<0.000000e+00> : vector<8x512xf32>
    %113 = tpu.matmul %112, %1, %cst_70 {dimension_numbers = #tpu.dot_dimension_numbers<[1], [0], [0], [1], [0, 0, 1, 1], [], []>} : vector<8x128xf32>, vector<128x512xf32>, vector<8x512xf32> -> vector<8x512xf32>
    %114 = arith.addf %111, %113 : vector<8x512xf32>
    %115 = vector.extract_strided_slice %114 {offsets = [0, 0], sizes = [8, 384], strides = [1, 1]} : vector<8x512xf32> to vector<8x384xf32>
    %116 = arith.negf %115 : vector<8x384xf32>
    %117 = math.exp %116 : vector<8x384xf32>
    %cst_71 = arith.constant 1.000000e+00 : f32
    %118 = vector.broadcast %cst_71 : f32 to vector<8x384xf32>
    %119 = arith.addf %118, %117 : vector<8x384xf32>
    %120 = arith.divf %118, %119 : vector<8x384xf32>
    %121 = vector.extract_strided_slice %120 {offsets = [0, 0], sizes = [8, 128], strides = [1, 1]} : vector<8x384xf32> to vector<8x128xf32>
    %122 = vector.extract_strided_slice %120 {offsets = [0, 128], sizes = [8, 128], strides = [1, 1]} : vector<8x384xf32> to vector<8x128xf32>
    %123 = vector.extract_strided_slice %120 {offsets = [0, 256], sizes = [8, 128], strides = [1, 1]} : vector<8x384xf32> to vector<8x128xf32>
    %124 = vector.extract_strided_slice %114 {offsets = [0, 384], sizes = [8, 128], strides = [1, 1]} : vector<8x512xf32> to vector<8x128xf32>
    %125 = math.tanh %124 : vector<8x128xf32>
    %c0_72 = arith.constant 0 : index
    %c0_73 = arith.constant 0 : index
    %126 = vector.load %arg8[%c0_72, %c0_73] : memref<8x128xf32, #tpu.memory_space<vmem>>, vector<8x128xf32>
    %127 = arith.mulf %122, %126 : vector<8x128xf32>
    %128 = arith.mulf %121, %125 : vector<8x128xf32>
    %129 = arith.addf %127, %128 : vector<8x128xf32>
    %c0_74 = arith.constant 0 : index
    %c0_75 = arith.constant 0 : index
    %130 = vector.load %arg8[%c0_74, %c0_75] : memref<8x128xf32, #tpu.memory_space<vmem>>, vector<8x128xf32>
    tpu.vector_store %arg8[%c0_74, %c0_75], %129 {strides = array<i32>} : memref<8x128xf32, #tpu.memory_space<vmem>>, vector<8x128xf32>,
    %131 = math.tanh %129 : vector<8x128xf32>
    %132 = arith.mulf %123, %131 : vector<8x128xf32>
    %c0_76 = arith.constant 0 : index
    %c0_77 = arith.constant 0 : index
    %133 = vector.load %arg7[%c0_76, %c0_77] : memref<8x128xf32, #tpu.memory_space<vmem>>, vector<8x128xf32>
    tpu.vector_store %arg7[%c0_76, %c0_77], %132 {strides = array<i32>} : memref<8x128xf32, #tpu.memory_space<vmem>>, vector<8x128xf32>,
    %c5 = arith.constant 5 : index
    %c0_78 = arith.constant 0 : index
    %c0_79 = arith.constant 0 : index
    %134 = vector.load %arg6[%c5, %c0_78, %c0_79] : memref<8x8x512xf32, #tpu.memory_space<vmem>>, vector<1x8x512xf32>
    %135 = vector.shape_cast %134 : vector<1x8x512xf32> to vector<8x512xf32>
    %c0_80 = arith.constant 0 : index
    %c0_81 = arith.constant 0 : index
    %136 = vector.load %arg7[%c0_80, %c0_81] : memref<8x128xf32, #tpu.memory_space<vmem>>, vector<8x128xf32>
    %cst_82 = arith.constant dense<0.000000e+00> : vector<8x512xf32>
    %137 = tpu.matmul %136, %1, %cst_82 {dimension_numbers = #tpu.dot_dimension_numbers<[1], [0], [0], [1], [0, 0, 1, 1], [], []>} : vector<8x128xf32>, vector<128x512xf32>, vector<8x512xf32> -> vector<8x512xf32>
    %138 = arith.addf %135, %137 : vector<8x512xf32>
    %139 = vector.extract_strided_slice %138 {offsets = [0, 0], sizes = [8, 384], strides = [1, 1]} : vector<8x512xf32> to vector<8x384xf32>
    %140 = arith.negf %139 : vector<8x384xf32>
    %141 = math.exp %140 : vector<8x384xf32>
    %cst_83 = arith.constant 1.000000e+00 : f32
    %142 = vector.broadcast %cst_83 : f32 to vector<8x384xf32>
    %143 = arith.addf %142, %141 : vector<8x384xf32>
    %144 = arith.divf %142, %143 : vector<8x384xf32>
    %145 = vector.extract_strided_slice %144 {offsets = [0, 0], sizes = [8, 128], strides = [1, 1]} : vector<8x384xf32> to vector<8x128xf32>
    %146 = vector.extract_strided_slice %144 {offsets = [0, 128], sizes = [8, 128], strides = [1, 1]} : vector<8x384xf32> to vector<8x128xf32>
    %147 = vector.extract_strided_slice %144 {offsets = [0, 256], sizes = [8, 128], strides = [1, 1]} : vector<8x384xf32> to vector<8x128xf32>
    %148 = vector.extract_strided_slice %138 {offsets = [0, 384], sizes = [8, 128], strides = [1, 1]} : vector<8x512xf32> to vector<8x128xf32>
    %149 = math.tanh %148 : vector<8x128xf32>
    %c0_84 = arith.constant 0 : index
    %c0_85 = arith.constant 0 : index
    %150 = vector.load %arg8[%c0_84, %c0_85] : memref<8x128xf32, #tpu.memory_space<vmem>>, vector<8x128xf32>
    %151 = arith.mulf %146, %150 : vector<8x128xf32>
    %152 = arith.mulf %145, %149 : vector<8x128xf32>
    %153 = arith.addf %151, %152 : vector<8x128xf32>
    %c0_86 = arith.constant 0 : index
    %c0_87 = arith.constant 0 : index
    %154 = vector.load %arg8[%c0_86, %c0_87] : memref<8x128xf32, #tpu.memory_space<vmem>>, vector<8x128xf32>
    tpu.vector_store %arg8[%c0_86, %c0_87], %153 {strides = array<i32>} : memref<8x128xf32, #tpu.memory_space<vmem>>, vector<8x128xf32>,
    %155 = math.tanh %153 : vector<8x128xf32>
    %156 = arith.mulf %147, %155 : vector<8x128xf32>
    %c0_88 = arith.constant 0 : index
    %c0_89 = arith.constant 0 : index
    %157 = vector.load %arg7[%c0_88, %c0_89] : memref<8x128xf32, #tpu.memory_space<vmem>>, vector<8x128xf32>
    tpu.vector_store %arg7[%c0_88, %c0_89], %156 {strides = array<i32>} : memref<8x128xf32, #tpu.memory_space<vmem>>, vector<8x128xf32>,
    %c6 = arith.constant 6 : index
    %c0_90 = arith.constant 0 : index
    %c0_91 = arith.constant 0 : index
    %158 = vector.load %arg6[%c6, %c0_90, %c0_91] : memref<8x8x512xf32, #tpu.memory_space<vmem>>, vector<1x8x512xf32>
    %159 = vector.shape_cast %158 : vector<1x8x512xf32> to vector<8x512xf32>
    %c0_92 = arith.constant 0 : index
    %c0_93 = arith.constant 0 : index
    %160 = vector.load %arg7[%c0_92, %c0_93] : memref<8x128xf32, #tpu.memory_space<vmem>>, vector<8x128xf32>
    %cst_94 = arith.constant dense<0.000000e+00> : vector<8x512xf32>
    %161 = tpu.matmul %160, %1, %cst_94 {dimension_numbers = #tpu.dot_dimension_numbers<[1], [0], [0], [1], [0, 0, 1, 1], [], []>} : vector<8x128xf32>, vector<128x512xf32>, vector<8x512xf32> -> vector<8x512xf32>
    %162 = arith.addf %159, %161 : vector<8x512xf32>
    %163 = vector.extract_strided_slice %162 {offsets = [0, 0], sizes = [8, 384], strides = [1, 1]} : vector<8x512xf32> to vector<8x384xf32>
    %164 = arith.negf %163 : vector<8x384xf32>
    %165 = math.exp %164 : vector<8x384xf32>
    %cst_95 = arith.constant 1.000000e+00 : f32
    %166 = vector.broadcast %cst_95 : f32 to vector<8x384xf32>
    %167 = arith.addf %166, %165 : vector<8x384xf32>
    %168 = arith.divf %166, %167 : vector<8x384xf32>
    %169 = vector.extract_strided_slice %168 {offsets = [0, 0], sizes = [8, 128], strides = [1, 1]} : vector<8x384xf32> to vector<8x128xf32>
    %170 = vector.extract_strided_slice %168 {offsets = [0, 128], sizes = [8, 128], strides = [1, 1]} : vector<8x384xf32> to vector<8x128xf32>
    %171 = vector.extract_strided_slice %168 {offsets = [0, 256], sizes = [8, 128], strides = [1, 1]} : vector<8x384xf32> to vector<8x128xf32>
    %172 = vector.extract_strided_slice %162 {offsets = [0, 384], sizes = [8, 128], strides = [1, 1]} : vector<8x512xf32> to vector<8x128xf32>
    %173 = math.tanh %172 : vector<8x128xf32>
    %c0_96 = arith.constant 0 : index
    %c0_97 = arith.constant 0 : index
    %174 = vector.load %arg8[%c0_96, %c0_97] : memref<8x128xf32, #tpu.memory_space<vmem>>, vector<8x128xf32>
    %175 = arith.mulf %170, %174 : vector<8x128xf32>
    %176 = arith.mulf %169, %173 : vector<8x128xf32>
    %177 = arith.addf %175, %176 : vector<8x128xf32>
    %c0_98 = arith.constant 0 : index
    %c0_99 = arith.constant 0 : index
    %178 = vector.load %arg8[%c0_98, %c0_99] : memref<8x128xf32, #tpu.memory_space<vmem>>, vector<8x128xf32>
    tpu.vector_store %arg8[%c0_98, %c0_99], %177 {strides = array<i32>} : memref<8x128xf32, #tpu.memory_space<vmem>>, vector<8x128xf32>,
    %179 = math.tanh %177 : vector<8x128xf32>
    %180 = arith.mulf %171, %179 : vector<8x128xf32>
    %c0_100 = arith.constant 0 : index
    %c0_101 = arith.constant 0 : index
    %181 = vector.load %arg7[%c0_100, %c0_101] : memref<8x128xf32, #tpu.memory_space<vmem>>, vector<8x128xf32>
    tpu.vector_store %arg7[%c0_100, %c0_101], %180 {strides = array<i32>} : memref<8x128xf32, #tpu.memory_space<vmem>>, vector<8x128xf32>,
    %c7 = arith.constant 7 : index
    %c0_102 = arith.constant 0 : index
    %c0_103 = arith.constant 0 : index
    %182 = vector.load %arg6[%c7, %c0_102, %c0_103] : memref<8x8x512xf32, #tpu.memory_space<vmem>>, vector<1x8x512xf32>
    %183 = vector.shape_cast %182 : vector<1x8x512xf32> to vector<8x512xf32>
    %c0_104 = arith.constant 0 : index
    %c0_105 = arith.constant 0 : index
    %184 = vector.load %arg7[%c0_104, %c0_105] : memref<8x128xf32, #tpu.memory_space<vmem>>, vector<8x128xf32>
    %cst_106 = arith.constant dense<0.000000e+00> : vector<8x512xf32>
    %185 = tpu.matmul %184, %1, %cst_106 {dimension_numbers = #tpu.dot_dimension_numbers<[1], [0], [0], [1], [0, 0, 1, 1], [], []>} : vector<8x128xf32>, vector<128x512xf32>, vector<8x512xf32> -> vector<8x512xf32>
    %186 = arith.addf %183, %185 : vector<8x512xf32>
    %187 = vector.extract_strided_slice %186 {offsets = [0, 0], sizes = [8, 384], strides = [1, 1]} : vector<8x512xf32> to vector<8x384xf32>
    %188 = arith.negf %187 : vector<8x384xf32>
    %189 = math.exp %188 : vector<8x384xf32>
    %cst_107 = arith.constant 1.000000e+00 : f32
    %190 = vector.broadcast %cst_107 : f32 to vector<8x384xf32>
    %191 = arith.addf %190, %189 : vector<8x384xf32>
    %192 = arith.divf %190, %191 : vector<8x384xf32>
    %193 = vector.extract_strided_slice %192 {offsets = [0, 0], sizes = [8, 128], strides = [1, 1]} : vector<8x384xf32> to vector<8x128xf32>
    %194 = vector.extract_strided_slice %192 {offsets = [0, 128], sizes = [8, 128], strides = [1, 1]} : vector<8x384xf32> to vector<8x128xf32>
    %195 = vector.extract_strided_slice %192 {offsets = [0, 256], sizes = [8, 128], strides = [1, 1]} : vector<8x384xf32> to vector<8x128xf32>
    %196 = vector.extract_strided_slice %186 {offsets = [0, 384], sizes = [8, 128], strides = [1, 1]} : vector<8x512xf32> to vector<8x128xf32>
    %197 = math.tanh %196 : vector<8x128xf32>
    %c0_108 = arith.constant 0 : index
    %c0_109 = arith.constant 0 : index
    %198 = vector.load %arg8[%c0_108, %c0_109] : memref<8x128xf32, #tpu.memory_space<vmem>>, vector<8x128xf32>
    %199 = arith.mulf %194, %198 : vector<8x128xf32>
    %200 = arith.mulf %193, %197 : vector<8x128xf32>
    %201 = arith.addf %199, %200 : vector<8x128xf32>
    %c0_110 = arith.constant 0 : index
    %c0_111 = arith.constant 0 : index
    %202 = vector.load %arg8[%c0_110, %c0_111] : memref<8x128xf32, #tpu.memory_space<vmem>>, vector<8x128xf32>
    tpu.vector_store %arg8[%c0_110, %c0_111], %201 {strides = array<i32>} : memref<8x128xf32, #tpu.memory_space<vmem>>, vector<8x128xf32>,
    %203 = math.tanh %201 : vector<8x128xf32>
    %204 = arith.mulf %195, %203 : vector<8x128xf32>
    %c0_112 = arith.constant 0 : index
    %c0_113 = arith.constant 0 : index
    %205 = vector.load %arg7[%c0_112, %c0_113] : memref<8x128xf32, #tpu.memory_space<vmem>>, vector<8x128xf32>
    tpu.vector_store %arg7[%c0_112, %c0_113], %204 {strides = array<i32>} : memref<8x128xf32, #tpu.memory_space<vmem>>, vector<8x128xf32>,
    %c0_114 = arith.constant 0 : index
    %c0_115 = arith.constant 0 : index
    %206 = vector.load %arg7[%c0_114, %c0_115] : memref<8x128xf32, #tpu.memory_space<vmem>>, vector<8x128xf32>
    %c0_116 = arith.constant 0 : index
    %c0_117 = arith.constant 0 : index
    %207 = vector.load %arg5[%c0_116, %c0_117] : memref<8x128xf32, #tpu.memory_space<vmem>>, vector<8x128xf32>
    tpu.vector_store %arg5[%c0_116, %c0_117], %206 {strides = array<i32>} : memref<8x128xf32, #tpu.memory_space<vmem>>, vector<8x128xf32>,
    return
  }
  func.func @transform_0(%arg0: i32) -> (i32, i32, i32) {
    %c0_i32 = arith.constant 0 : i32
    %c0_i32_0 = arith.constant 0 : i32
    %c0_i32_1 = arith.constant 0 : i32
    return %c0_i32, %arg0, %c0_i32_0 : i32, i32, i32
  }
  func.func @transform_1(%arg0: i32) -> (i32, i32) {
    %c0_i32 = arith.constant 0 : i32
    %c0_i32_0 = arith.constant 0 : i32
    %c0_i32_1 = arith.constant 0 : i32
    return %c0_i32, %c0_i32_0 : i32, i32
  }
  func.func @transform_2(%arg0: i32) -> (i32, i32) {
    %c0_i32 = arith.constant 0 : i32
    %c0_i32_0 = arith.constant 0 : i32
    %c0_i32_1 = arith.constant 0 : i32
    return %c0_i32, %c0_i32_0 : i32, i32
  }
  func.func @transform_3(%arg0: i32) -> (i32, i32) {
    %c0_i32 = arith.constant 0 : i32
    %c0_i32_0 = arith.constant 0 : i32
    %c0_i32_1 = arith.constant 0 : i32
    return %c0_i32, %c0_i32_0 : i32, i32
  }
  func.func @transform_4(%arg0: i32) -> (i32, i32) {
    %c0_i32 = arith.constant 0 : i32
    %c0_i32_0 = arith.constant 0 : i32
    return %arg0, %c0_i32 : i32, i32
  }
}

</mosaic_0001>

<llo_original>
// kernel: tpu_custom_call.1
$region0: #{tpu_custom_call.1}
  #allocation0 [shape = 'u32[]', space=smem, size = 0x4, offset = 0x4, fixed_abs, tag = 'smem constant byte address 0x4 - core index']
  #allocation1 [shape = 'u32[144,128]{1,0:T(1,128)}', space=vmem, size = 0x12000, scoped, tag = 'internal scratch']
  #allocation2 [shape = 'f32[8,8,512]{2,1,0:T(8,128)}', space=vmem, size = 0x20000, scoped, tag = 'scratch operand']
  #allocation3 [shape = 'f32[8,128]{1,0:T(8,128)}', space=vmem, size = 0x1000, scoped, tag = 'scratch operand']
  #allocation4 [shape = 'f32[8,128]{1,0:T(8,128)}', space=vmem, size = 0x1000, scoped, tag = 'scratch operand']
  %s0 = inlined_call_operand.vmem [shape: f32[8,8,4], index: 0, kind: input, shape index: {}]
  %s1 = inlined_call_operand.vmem [shape: f32[4,512], index: 1, kind: input, shape index: {}]
  %s2 = inlined_call_operand.hbm [shape: f32[128,512], index: 2, kind: input, shape index: {}]
  %s3 = inlined_call_operand.vmem [shape: f32[1,512], index: 3, kind: input, shape index: {}]
  %s4 = inlined_call_operand.hbm [shape: f32[8,128], index: 4, kind: output, shape index: {}]
  %s5 = sld [smem:[#allocation0]]
  $region30: #{tpu_custom_call.1} parent=0
    _
  %s7 = ssub.s32 1, %s5
  %s8 = scalar_select 0, %s7, %s5
  $region1: #{tpu_custom_call.1} parent=0
    #allocation5 [shape = 'u8[262144]{0}', space=vmem, size = 0x40000, scoped, tag = 'input window, operand 2, single buffered']
    #allocation6 [shape = 's32[1]{0}', space=sflag, size = 0x4, scoped, tag = 'scoped memory for tpu_custom_call.1']
    #allocation7 [shape = 's32[1]{0}', space=sflag, size = 0x4, scoped, tag = 'scoped memory for tpu_custom_call.1']
    #allocation8 [shape = 'u8[4096]{0}', space=vmem, size = 0x1000, scoped, tag = 'output window, operand 0, single buffered']
    %9 = vsyncpa [#allocation6], 0
    %10 = vsyncpa [#allocation7], 0
    // Predicated region
    $region2: #{tpu_custom_call.1} parent=1 // pred_check
      _
    $region3: #{tpu_custom_call.1} parent=1 // pred_check_branch
      %12 = sbr.rel (0) target = $region5
    $region4: #{tpu_custom_call.1} parent=1 // pred_region
      _
    $region5: #{tpu_custom_call.1} parent=1 // pred_fallthru
      _
    // Predicated region
    $region6: #{tpu_custom_call.1} parent=1 // pred_check
      _
    $region7: #{tpu_custom_call.1} parent=1 // pred_check_branch
      %14 = sbr.rel (0) target = $region9
    $region8: #{tpu_custom_call.1} parent=1 // pred_region
      _
    $region9: #{tpu_custom_call.1} parent=1 // pred_fallthru
      _
    // Predicated region
    $region10: #{tpu_custom_call.1} parent=1 // pred_check
      _
    $region11: #{tpu_custom_call.1} parent=1 // pred_check_branch
      %16 = sbr.rel (0) target = $region13
    $region12: #{tpu_custom_call.1} parent=1 // pred_region
      %s18 = ssub.s32 8192, 8192
      %19 = vsyncadd [#allocation6], %s18
      %s20 = sshll.u32 [#allocation5], 4
      %s21 = int_to_ptr.vmem [resolvable:$true] %s20
      %26 = dma.hbm_to_vmem [thread:$0]  %s2, 8192, %s21, [#allocation6], 512, 512, 32
    $region13: #{tpu_custom_call.1} parent=1 // pred_fallthru
      _
    // Predicated region
    $region14: #{tpu_custom_call.1} parent=1 // pred_check
      _
    $region15: #{tpu_custom_call.1} parent=1 // pred_check_branch
      %28 = sbr.rel (0) target = $region17
    $region16: #{tpu_custom_call.1} parent=1 // pred_region
      _
    $region17: #{tpu_custom_call.1} parent=1 // pred_fallthru
      _
    // Predicated region
    $region18: #{tpu_custom_call.1} parent=1 // pred_check
      _
    $region19: #{tpu_custom_call.1} parent=1 // pred_check_branch
      %30 = sbr.rel (0) target = $region21
    $region20: #{tpu_custom_call.1} parent=1 // pred_region
      %31 = dma.done [#allocation6], 8192
    $region21: #{tpu_custom_call.1} parent=1 // pred_fallthru
      _
    %v32 = vld [vmem:[%s1] sm:$0xff]
    %v33 = vld [vmem:[%s1 + $0x8] sm:$0xff]
    %v34 = vld [vmem:[#allocation5] sm:$0xff]
    %v35 = vld [vmem:[#allocation5 + $0x8] sm:$0xff]
    %v36 = vld [vmem:[#allocation5 + $0x10] sm:$0xff]
    %v37 = vld [vmem:[#allocation5 + $0x18] sm:$0xff]
    %v38 = vld [vmem:[#allocation5 + $0x20] sm:$0xff]
    %v39 = vld [vmem:[#allocation5 + $0x28] sm:$0xff]
    %v40 = vld [vmem:[#allocation5 + $0x30] sm:$0xff]
    %v41 = vld [vmem:[#allocation5 + $0x38] sm:$0xff]
    %v42 = vld [vmem:[#allocation5 + $0x40] sm:$0xff]
    %v43 = vld [vmem:[#allocation5 + $0x48] sm:$0xff]
    %v44 = vld [vmem:[#allocation5 + $0x50] sm:$0xff]
    %v45 = vld [vmem:[#allocation5 + $0x58] sm:$0xff]
    %v46 = vld [vmem:[#allocation5 + $0x60] sm:$0xff]
    %v47 = vld [vmem:[#allocation5 + $0x68] sm:$0xff]
    %v48 = vld [vmem:[#allocation5 + $0x70] sm:$0xff]
    %v49 = vld [vmem:[#allocation5 + $0x78] sm:$0xff]
    %v50 = vld [vmem:[#allocation5 + $0x80] sm:$0xff]
    %v51 = vld [vmem:[#allocation5 + $0x88] sm:$0xff]
    %v52 = vld [vmem:[#allocation5 + $0x90] sm:$0xff]
    %v53 = vld [vmem:[#allocation5 + $0x98] sm:$0xff]
    %v54 = vld [vmem:[#allocation5 + $0xa0] sm:$0xff]
    %v55 = vld [vmem:[#allocation5 + $0xa8] sm:$0xff]
    %v56 = vld [vmem:[#allocation5 + $0xb0] sm:$0xff]
    %v57 = vld [vmem:[#allocation5 + $0xb8] sm:$0xff]
    %v58 = vld [vmem:[#allocation5 + $0xc0] sm:$0xff]
    %v59 = vld [vmem:[#allocation5 + $0xc8] sm:$0xff]
    %v60 = vld [vmem:[#allocation5 + $0xd0] sm:$0xff]
    %v61 = vld [vmem:[#allocation5 + $0xd8] sm:$0xff]
    %v62 = vld [vmem:[#allocation5 + $0xe0] sm:$0xff]
    %v63 = vld [vmem:[#allocation5 + $0xe8] sm:$0xff]
    %v64 = vld [vmem:[#allocation5 + $0xf0] sm:$0xff]
    %v65 = vld [vmem:[#allocation5 + $0xf8] sm:$0xff]
    %v66 = vld [vmem:[#allocation5 + $0x100] sm:$0xff]
    %v67 = vld [vmem:[#allocation5 + $0x108] sm:$0xff]
    %v68 = vld [vmem:[#allocation5 + $0x110] sm:$0xff]
    %v69 = vld [vmem:[#allocation5 + $0x118] sm:$0xff]
    %v70 = vld [vmem:[#allocation5 + $0x120] sm:$0xff]
    %v71 = vld [vmem:[#allocation5 + $0x128] sm:$0xff]
    %v72 = vld [vmem:[#allocation5 + $0x130] sm:$0xff]
    %v73 = vld [vmem:[#allocation5 + $0x138] sm:$0xff]
    %v74 = vld [vmem:[#allocation5 + $0x140] sm:$0xff]
    %v75 = vld [vmem:[#allocation5 + $0x148] sm:$0xff]
    %v76 = vld [vmem:[#allocation5 + $0x150] sm:$0xff]
    %v77 = vld [vmem:[#allocation5 + $0x158] sm:$0xff]
    %v78 = vld [vmem:[#allocation5 + $0x160] sm:$0xff]
    %v79 = vld [vmem:[#allocation5 + $0x168] sm:$0xff]
    %v80 = vld [vmem:[#allocation5 + $0x170] sm:$0xff]
    %v81 = vld [vmem:[#allocation5 + $0x178] sm:$0xff]
    %v82 = vld [vmem:[#allocation5 + $0x180] sm:$0xff]
    %v83 = vld [vmem:[#allocation5 + $0x188] sm:$0xff]
    %v84 = vld [vmem:[#allocation5 + $0x190] sm:$0xff]
    %v85 = vld [vmem:[#allocation5 + $0x198] sm:$0xff]
    %v86 = vld [vmem:[#allocation5 + $0x1a0] sm:$0xff]
    %v87 = vld [vmem:[#allocation5 + $0x1a8] sm:$0xff]
    %v88 = vld [vmem:[#allocation5 + $0x1b0] sm:$0xff]
    %v89 = vld [vmem:[#allocation5 + $0x1b8] sm:$0xff]
    %v90 = vld [vmem:[#allocation5 + $0x1c0] sm:$0xff]
    %v91 = vld [vmem:[#allocation5 + $0x1c8] sm:$0xff]
    %v92 = vld [vmem:[#allocation5 + $0x1d0] sm:$0xff]
    %v93 = vld [vmem:[#allocation5 + $0x1d8] sm:$0xff]
    %v94 = vld [vmem:[#allocation5 + $0x1e0] sm:$0xff]
    %v95 = vld [vmem:[#allocation5 + $0x1e8] sm:$0xff]
    %v96 = vld [vmem:[#allocation5 + $0x1f0] sm:$0xff]
    %v97 = vld [vmem:[#allocation5 + $0x1f8] sm:$0xff]
    %v98 = vld [vmem:[%s3] sm:$0xf]
    %v99 = vld [vmem:[%s0] sm:$0xff]
    %v100 = vld [vmem:[%s0 + $0x8] sm:$0xff]
    %v101 = vld [vmem:[%s0 + $0x10] sm:$0xff]
    %v102 = vld [vmem:[%s0 + $0x18] sm:$0xff]
    %v103 = vld [vmem:[%s0 + $0x20] sm:$0xff]
    %v104 = vld [vmem:[%s0 + $0x28] sm:$0xff]
    %v105 = vld [vmem:[%s0 + $0x30] sm:$0xff]
    %v106 = vld [vmem:[%s0 + $0x38] sm:$0xff]
    %v108 = vlaneseq
    %v109 = vshrl.u32 %v108, 7
    %v110 = vsub.s32 0, %v109
    %v111 = vrot.slane %v98, %v110
    %v112 = vlaneseq
    %v113 = vshrl.u32 %v112, 7
    %v114 = vsub.s32 1, %v113
    %v115 = vrot.slane %v98, %v114
    %v116 = vlaneseq
    %v117 = vshrl.u32 %v116, 7
    %v118 = vsub.s32 2, %v117
    %v119 = vrot.slane %v98, %v118
    %v120 = vlaneseq
    %v121 = vshrl.u32 %v120, 7
    %v122 = vsub.s32 3, %v121
    %v123 = vrot.slane %v98, %v122
    %v130 = vcombine.high %v32, %v32
    %v131 = vcombine.high %v33, %v33
    %vm132 = vcmask 31744
    %v134 = vsel %vm132, %v99, 0
    %v137 = vsel %vm132, %v100, 0
    %v140 = vsel %vm132, %v101, 0
    %v143 = vsel %vm132, %v102, 0
    %v146 = vsel %vm132, %v103, 0
    %v149 = vsel %vm132, %v104, 0
    %v152 = vsel %vm132, %v105, 0
    %v155 = vsel %vm132, %v106, 0
    %vm157 = vcmask 1043456
    %v158 = vsel %vm157, %v32, 0
    %v160 = vsel %vm157, %v130, 0
    %v162 = vsel %vm157, %v33, 0
    %v164 = vsel %vm157, %v131, 0
    %166 = vmatprep.subr.mxu0 %v160
    %167 = vmatpush1.msra.mxu0 %v158
    %168 = vmatprep.subr.mxu0 0.0
    %169 = vmatpush1.msra.mxu0 0.0
    %170 = vmatprep.subr.mxu0 0.0
    %171 = vmatpush1.msra.mxu0 0.0
    %172 = vmatprep.subr.mxu0 0.0
    %173 = vmatpush1.msra.mxu0 0.0
    %174 = vmatprep.subr.mxu0 0.0
    %175 = vmatpush1.msra.mxu0 0.0
    %176 = vmatprep.subr.mxu0 0.0
    %177 = vmatpush1.msra.mxu0 0.0
    %178 = vmatprep.subr.mxu0 0.0
    %179 = vmatpush1.msra.mxu0 0.0
    %180 = vmatprep.subr.mxu0 0.0
    %181 = vmatpush1.msra.mxu0 0.0
    %182 = vmatprep.subr.mxu0 0.0
    %183 = vmatpush1.msra.mxu0 0.0
    %184 = vmatprep.subr.mxu0 0.0
    %185 = vmatpush1.msra.mxu0 0.0
    %186 = vmatprep.subr.mxu0 0.0
    %187 = vmatpush1.msra.mxu0 0.0
    %188 = vmatprep.subr.mxu0 0.0
    %189 = vmatpush1.msra.mxu0 0.0
    %190 = vmatprep.subr.mxu0 0.0
    %191 = vmatpush1.msra.mxu0 0.0
    %192 = vmatprep.subr.mxu0 0.0
    %193 = vmatpush1.msra.mxu0 0.0
    %194 = vmatprep.subr.mxu0 0.0
    %195 = vmatpush1.msra.mxu0 0.0
    %196 = vmatprep.subr.mxu0 0.0
    %197 = vmatpush1.msra.mxu0 0.0
    %198 = vmatprep.subr.mxu0 0.0
    %199 = vmatpush1.msra.mxu0 0.0
    %200 = vmatprep.subr.mxu0 0.0
    %201 = vmatpush1.msra.mxu0 0.0
    %202 = vmatprep.subr.mxu0 0.0
    %203 = vmatpush1.msra.mxu0 0.0
    %204 = vmatprep.subr.mxu0 0.0
    %205 = vmatpush1.msra.mxu0 0.0
    %206 = vmatprep.subr.mxu0 0.0
    %207 = vmatpush1.msra.mxu0 0.0
    %208 = vmatprep.subr.mxu0 0.0
    %209 = vmatpush1.msra.mxu0 0.0
    %210 = vmatprep.subr.mxu0 0.0
    %211 = vmatpush1.msra.mxu0 0.0
    %212 = vmatprep.subr.mxu0 0.0
    %213 = vmatpush1.msra.mxu0 0.0
    %214 = vmatprep.subr.mxu0 0.0
    %215 = vmatpush1.msra.mxu0 0.0
    %216 = vmatprep.subr.mxu0 0.0
    %217 = vmatpush1.msra.mxu0 0.0
    %218 = vmatprep.subr.mxu0 0.0
    %219 = vmatpush1.msra.mxu0 0.0
    %220 = vmatprep.subr.mxu0 0.0
    %221 = vmatpush1.msra.mxu0 0.0
    %222 = vmatprep.subr.mxu0 0.0
    %223 = vmatpush1.msra.mxu0 0.0
    %224 = vmatprep.subr.mxu0 0.0
    %225 = vmatpush1.msra.mxu0 0.0
    %226 = vmatprep.subr.mxu0 0.0
    %227 = vmatpush1.msra.mxu0 0.0
    %228 = vmatprep.subr.mxu0 0.0
    %229 = vmatpush1.msra.mxu0 0.0
    %230 = vmatprep.mubr.f32.mxu0 0.0
    %231 = vmatmul.mubr.f32.gmra.mrb[0].mxu0 %v134
    %v232 = vpop.f32.mrb[0].mxu0
    %v233 = vadd.f32 %v111, %v232
    %v234 = vpop.f32.mrb[0].mxu0
    %v235 = vadd.f32 %v115, %v234
    %236 = vmatprep.mubr.f32.mxu0 0.0
    %237 = vmatmul.mubr.f32.gmra.mrb[0].mxu0 %v137
    %v238 = vpop.f32.mrb[0].mxu0
    %v239 = vadd.f32 %v111, %v238
    %v240 = vpop.f32.mrb[0].mxu0
    %v241 = vadd.f32 %v115, %v240
    %242 = vmatprep.mubr.f32.mxu0 0.0
    %243 = vmatmul.mubr.f32.gmra.mrb[0].mxu0 %v140
    %v244 = vpop.f32.mrb[0].mxu0
    %v245 = vadd.f32 %v111, %v244
    %v246 = vpop.f32.mrb[0].mxu0
    %v247 = vadd.f32 %v115, %v246
    %248 = vmatprep.mubr.f32.mxu0 0.0
    %249 = vmatmul.mubr.f32.gmra.mrb[0].mxu0 %v143
    %v250 = vpop.f32.mrb[0].mxu0
    %v251 = vadd.f32 %v111, %v250
    %v252 = vpop.f32.mrb[0].mxu0
    %v253 = vadd.f32 %v115, %v252
    %254 = vmatprep.mubr.f32.mxu0 0.0
    %255 = vmatmul.mubr.f32.gmra.mrb[0].mxu0 %v146
    %v256 = vpop.f32.mrb[0].mxu0
    %v257 = vadd.f32 %v111, %v256
    %v258 = vpop.f32.mrb[0].mxu0
    %v259 = vadd.f32 %v115, %v258
    %260 = vmatprep.mubr.f32.mxu0 0.0
    %261 = vmatmul.mubr.f32.gmra.mrb[0].mxu0 %v149
    %v262 = vpop.f32.mrb[0].mxu0
    %v263 = vadd.f32 %v111, %v262
    %v264 = vpop.f32.mrb[0].mxu0
    %v265 = vadd.f32 %v115, %v264
    %266 = vmatprep.mubr.f32.mxu0 0.0
    %267 = vmatmul.mubr.f32.gmra.mrb[0].mxu0 %v152
    %v268 = vpop.f32.mrb[0].mxu0
    %v269 = vadd.f32 %v111, %v268
    %v270 = vpop.f32.mrb[0].mxu0
    %v271 = vadd.f32 %v115, %v270
    %272 = vmatprep.mubr.f32.mxu0 0.0
    %273 = vmatmul.mubr.f32.gmra.mrb[0].mxu0 %v155
    %v274 = vpop.f32.mrb[0].mxu0
    %v275 = vadd.f32 %v111, %v274
    %v276 = vpop.f32.mrb[0].mxu0
    %v277 = vadd.f32 %v115, %v276
    %278 = vdwg.mxu0
    %279 = vmatprep.subr.mxu0 %v164
    %280 = vmatpush1.msra.mxu0 %v162
    %281 = vmatprep.subr.mxu0 0.0
    %282 = vmatpush1.msra.mxu0 0.0
    %283 = vmatprep.subr.mxu0 0.0
    %284 = vmatpush1.msra.mxu0 0.0
    %285 = vmatprep.subr.mxu0 0.0
    %286 = vmatpush1.msra.mxu0 0.0
    %287 = vmatprep.subr.mxu0 0.0
    %288 = vmatpush1.msra.mxu0 0.0
    %289 = vmatprep.subr.mxu0 0.0
    %290 = vmatpush1.msra.mxu0 0.0
    %291 = vmatprep.subr.mxu0 0.0
    %292 = vmatpush1.msra.mxu0 0.0
    %293 = vmatprep.subr.mxu0 0.0
    %294 = vmatpush1.msra.mxu0 0.0
    %295 = vmatprep.subr.mxu0 0.0
    %296 = vmatpush1.msra.mxu0 0.0
    %297 = vmatprep.subr.mxu0 0.0
    %298 = vmatpush1.msra.mxu0 0.0
    %299 = vmatprep.subr.mxu0 0.0
    %300 = vmatpush1.msra.mxu0 0.0
    %301 = vmatprep.subr.mxu0 0.0
    %302 = vmatpush1.msra.mxu0 0.0
    %303 = vmatprep.subr.mxu0 0.0
    %304 = vmatpush1.msra.mxu0 0.0
    %305 = vmatprep.subr.mxu0 0.0
    %306 = vmatpush1.msra.mxu0 0.0
    %307 = vmatprep.subr.mxu0 0.0
    %308 = vmatpush1.msra.mxu0 0.0
    %309 = vmatprep.subr.mxu0 0.0
    %310 = vmatpush1.msra.mxu0 0.0
    %311 = vmatprep.subr.mxu0 0.0
    %312 = vmatpush1.msra.mxu0 0.0
    %313 = vmatprep.subr.mxu0 0.0
    %314 = vmatpush1.msra.mxu0 0.0
    %315 = vmatprep.subr.mxu0 0.0
    %316 = vmatpush1.msra.mxu0 0.0
    %317 = vmatprep.subr.mxu0 0.0
    %318 = vmatpush1.msra.mxu0 0.0
    %319 = vmatprep.subr.mxu0 0.0
    %320 = vmatpush1.msra.mxu0 0.0
    %321 = vmatprep.subr.mxu0 0.0
    %322 = vmatpush1.msra.mxu0 0.0
    %323 = vmatprep.subr.mxu0 0.0
    %324 = vmatpush1.msra.mxu0 0.0
    %325 = vmatprep.subr.mxu0 0.0
    %326 = vmatpush1.msra.mxu0 0.0
    %327 = vmatprep.subr.mxu0 0.0
    %328 = vmatpush1.msra.mxu0 0.0
    %329 = vmatprep.subr.mxu0 0.0
    %330 = vmatpush1.msra.mxu0 0.0
    %331 = vmatprep.subr.mxu0 0.0
    %332 = vmatpush1.msra.mxu0 0.0
    %333 = vmatprep.subr.mxu0 0.0
    %334 = vmatpush1.msra.mxu0 0.0
    %335 = vmatprep.subr.mxu0 0.0
    %336 = vmatpush1.msra.mxu0 0.0
    %337 = vmatprep.subr.mxu0 0.0
    %338 = vmatpush1.msra.mxu0 0.0
    %339 = vmatprep.subr.mxu0 0.0
    %340 = vmatpush1.msra.mxu0 0.0
    %341 = vmatprep.subr.mxu0 0.0
    %342 = vmatpush1.msra.mxu0 0.0
    %343 = vmatprep.mubr.f32.mxu0 0.0
    %344 = vmatmul.mubr.f32.gmra.mrb[0].mxu0 %v134
    %v345 = vpop.f32.mrb[0].mxu0
    %v346 = vadd.f32 %v119, %v345
    %v347 = vpop.f32.mrb[0].mxu0
    %v348 = vadd.f32 %v123, %v347
    %349 = vmatprep.mubr.f32.mxu0 0.0
    %350 = vmatmul.mubr.f32.gmra.mrb[0].mxu0 %v137
    %v351 = vpop.f32.mrb[0].mxu0
    %v352 = vadd.f32 %v119, %v351
    %v353 = vpop.f32.mrb[0].mxu0
    %v354 = vadd.f32 %v123, %v353
    %355 = vmatprep.mubr.f32.mxu0 0.0
    %356 = vmatmul.mubr.f32.gmra.mrb[0].mxu0 %v140
    %v357 = vpop.f32.mrb[0].mxu0
    %v358 = vadd.f32 %v119, %v357
    %v359 = vpop.f32.mrb[0].mxu0
    %v360 = vadd.f32 %v123, %v359
    %361 = vmatprep.mubr.f32.mxu0 0.0
    %362 = vmatmul.mubr.f32.gmra.mrb[0].mxu0 %v143
    %v363 = vpop.f32.mrb[0].mxu0
    %v364 = vadd.f32 %v119, %v363
    %v365 = vpop.f32.mrb[0].mxu0
    %v366 = vadd.f32 %v123, %v365
    %367 = vmatprep.mubr.f32.mxu0 0.0
    %368 = vmatmul.mubr.f32.gmra.mrb[0].mxu0 %v146
    %v369 = vpop.f32.mrb[0].mxu0
    %v370 = vadd.f32 %v119, %v369
    %v371 = vpop.f32.mrb[0].mxu0
    %v372 = vadd.f32 %v123, %v371
    %373 = vmatprep.mubr.f32.mxu0 0.0
    %374 = vmatmul.mubr.f32.gmra.mrb[0].mxu0 %v149
    %v375 = vpop.f32.mrb[0].mxu0
    %v376 = vadd.f32 %v119, %v375
    %v377 = vpop.f32.mrb[0].mxu0
    %v378 = vadd.f32 %v123, %v377
    %379 = vmatprep.mubr.f32.mxu0 0.0
    %380 = vmatmul.mubr.f32.gmra.mrb[0].mxu0 %v152
    %v381 = vpop.f32.mrb[0].mxu0
    %v382 = vadd.f32 %v119, %v381
    %v383 = vpop.f32.mrb[0].mxu0
    %v384 = vadd.f32 %v123, %v383
    %385 = vmatprep.mubr.f32.mxu0 0.0
    %386 = vmatmul.mubr.f32.gmra.mrb[0].mxu0 %v155
    %v387 = vpop.f32.mrb[0].mxu0
    %v388 = vadd.f32 %v119, %v387
    %v389 = vpop.f32.mrb[0].mxu0
    %v390 = vadd.f32 %v123, %v389
    %391 = vdwg.mxu0
    %392 = vst [vmem:[#allocation2] sm:$0xff] %v233
    %393 = vst [vmem:[#allocation2 + $0x8] sm:$0xff] %v235
    %394 = vst [vmem:[#allocation2 + $0x10] sm:$0xff] %v346
    %395 = vst [vmem:[#allocation2 + $0x18] sm:$0xff] %v348
    %396 = vst [vmem:[#allocation2 + $0x20] sm:$0xff] %v239
    %397 = vst [vmem:[#allocation2 + $0x28] sm:$0xff] %v241
    %398 = vst [vmem:[#allocation2 + $0x30] sm:$0xff] %v352
    %399 = vst [vmem:[#allocation2 + $0x38] sm:$0xff] %v354
    %400 = vst [vmem:[#allocation2 + $0x40] sm:$0xff] %v245
    %401 = vst [vmem:[#allocation2 + $0x48] sm:$0xff] %v247
    %402 = vst [vmem:[#allocation2 + $0x50] sm:$0xff] %v358
    %403 = vst [vmem:[#allocation2 + $0x58] sm:$0xff] %v360
    %404 = vst [vmem:[#allocation2 + $0x60] sm:$0xff] %v251
    %405 = vst [vmem:[#allocation2 + $0x68] sm:$0xff] %v253
    %406 = vst [vmem:[#allocation2 + $0x70] sm:$0xff] %v364
    %407 = vst [vmem:[#allocation2 + $0x78] sm:$0xff] %v366
    %408 = vst [vmem:[#allocation2 + $0x80] sm:$0xff] %v257
    %409 = vst [vmem:[#allocation2 + $0x88] sm:$0xff] %v259
    %410 = vst [vmem:[#allocation2 + $0x90] sm:$0xff] %v370
    %411 = vst [vmem:[#allocation2 + $0x98] sm:$0xff] %v372
    %412 = vst [vmem:[#allocation2 + $0xa0] sm:$0xff] %v263
    %413 = vst [vmem:[#allocation2 + $0xa8] sm:$0xff] %v265
    %414 = vst [vmem:[#allocation2 + $0xb0] sm:$0xff] %v376
    %415 = vst [vmem:[#allocation2 + $0xb8] sm:$0xff] %v378
    %416 = vst [vmem:[#allocation2 + $0xc0] sm:$0xff] %v269
    %417 = vst [vmem:[#allocation2 + $0xc8] sm:$0xff] %v271
    %418 = vst [vmem:[#allocation2 + $0xd0] sm:$0xff] %v382
    %419 = vst [vmem:[#allocation2 + $0xd8] sm:$0xff] %v384
    %420 = vst [vmem:[#allocation2 + $0xe0] sm:$0xff] %v275
    %421 = vst [vmem:[#allocation2 + $0xe8] sm:$0xff] %v277
    %422 = vst [vmem:[#allocation2 + $0xf0] sm:$0xff] %v388
    %423 = vst [vmem:[#allocation2 + $0xf8] sm:$0xff] %v390
    %424 = vst [vmem:[#allocation3] sm:$0xff] 0.0
    %425 = vst [vmem:[#allocation4] sm:$0xff] 0.0
    %v426 = vld [vmem:[#allocation2] sm:$0xff]
    %v427 = vld [vmem:[#allocation2 + $0x8] sm:$0xff]
    %v428 = vld [vmem:[#allocation2 + $0x10] sm:$0xff]
    %v429 = vld [vmem:[#allocation2 + $0x18] sm:$0xff]
    %v430 = vld [vmem:[#allocation3] sm:$0xff]
    %431 = vmatprep.subr.mxu0 %v35
    %432 = vmatpush1.msra.mxu0 %v34
    %433 = vmatprep.subr.mxu0 %v39
    %434 = vmatpush1.msra.mxu0 %v38
    %435 = vmatprep.subr.mxu0 %v43
    %436 = vmatpush1.msra.mxu0 %v42
    %437 = vmatprep.subr.mxu0 %v47
    %438 = vmatpush1.msra.mxu0 %v46
    %439 = vmatprep.subr.mxu0 %v51
    %440 = vmatpush1.msra.mxu0 %v50
    %441 = vmatprep.subr.mxu0 %v55
    %442 = vmatpush1.msra.mxu0 %v54
    %443 = vmatprep.subr.mxu0 %v59
    %444 = vmatpush1.msra.mxu0 %v58
    %445 = vmatprep.subr.mxu0 %v63
    %446 = vmatpush1.msra.mxu0 %v62
    %447 = vmatprep.subr.mxu0 %v67
    %448 = vmatpush1.msra.mxu0 %v66
    %449 = vmatprep.subr.mxu0 %v71
    %450 = vmatpush1.msra.mxu0 %v70
    %451 = vmatprep.subr.mxu0 %v75
    %452 = vmatpush1.msra.mxu0 %v74
    %453 = vmatprep.subr.mxu0 %v79
    %454 = vmatpush1.msra.mxu0 %v78
    %455 = vmatprep.subr.mxu0 %v83
    %456 = vmatpush1.msra.mxu0 %v82
    %457 = vmatprep.subr.mxu0 %v87
    %458 = vmatpush1.msra.mxu0 %v86
    %459 = vmatprep.subr.mxu0 %v91
    %460 = vmatpush1.msra.mxu0 %v90
    %461 = vmatprep.subr.mxu0 %v95
    %462 = vmatpush1.msra.mxu0 %v94
    %463 = vmatprep.subr.mxu0 0.0
    %464 = vmatpush1.msra.mxu0 0.0
    %465 = vmatprep.subr.mxu0 0.0
    %466 = vmatpush1.msra.mxu0 0.0
    %467 = vmatprep.subr.mxu0 0.0
    %468 = vmatpush1.msra.mxu0 0.0
    %469 = vmatprep.subr.mxu0 0.0
    %470 = vmatpush1.msra.mxu0 0.0
    %471 = vmatprep.subr.mxu0 0.0
    %472 = vmatpush1.msra.mxu0 0.0
    %473 = vmatprep.subr.mxu0 0.0
    %474 = vmatpush1.msra.mxu0 0.0
    %475 = vmatprep.subr.mxu0 0.0
    %476 = vmatpush1.msra.mxu0 0.0
    %477 = vmatprep.subr.mxu0 0.0
    %478 = vmatpush1.msra.mxu0 0.0
    %479 = vmatprep.subr.mxu0 0.0
    %480 = vmatpush1.msra.mxu0 0.0
    %481 = vmatprep.subr.mxu0 0.0
    %482 = vmatpush1.msra.mxu0 0.0
    %483 = vmatprep.subr.mxu0 0.0
    %484 = vmatpush1.msra.mxu0 0.0
    %485 = vmatprep.subr.mxu0 0.0
    %486 = vmatpush1.msra.mxu0 0.0
    %487 = vmatprep.subr.mxu0 0.0
    %488 = vmatpush1.msra.mxu0 0.0
    %489 = vmatprep.subr.mxu0 0.0
    %490 = vmatpush1.msra.mxu0 0.0
    %491 = vmatprep.subr.mxu0 0.0
    %492 = vmatpush1.msra.mxu0 0.0
    %493 = vmatprep.subr.mxu0 0.0
    %494 = vmatpush1.msra.mxu0 0.0
    %495 = vmatprep.mubr.f32.mxu0 0.0
    %496 = vmatmul.mubr.f32.gmra.mrb[0].mxu0 %v430
    %v497 = vpop.f32.mrb[0].mxu0
    %v498 = vadd.f32 0.0, %v497
    %v499 = vpop.f32.mrb[0].mxu0
    %v500 = vadd.f32 0.0, %v499
    %501 = vdwg.mxu0
    %502 = vmatprep.subr.mxu0 %v37
    %503 = vmatpush1.msra.mxu0 %v36
    %504 = vmatprep.subr.mxu0 %v41
    %505 = vmatpush1.msra.mxu0 %v40
    %506 = vmatprep.subr.mxu0 %v45
    %507 = vmatpush1.msra.mxu0 %v44
    %508 = vmatprep.subr.mxu0 %v49
    %509 = vmatpush1.msra.mxu0 %v48
    %510 = vmatprep.subr.mxu0 %v53
    %511 = vmatpush1.msra.mxu0 %v52
    %512 = vmatprep.subr.mxu0 %v57
    %513 = vmatpush1.msra.mxu0 %v56
    %514 = vmatprep.subr.mxu0 %v61
    %515 = vmatpush1.msra.mxu0 %v60
    %516 = vmatprep.subr.mxu0 %v65
    %517 = vmatpush1.msra.mxu0 %v64
    %518 = vmatprep.subr.mxu0 %v69
    %519 = vmatpush1.msra.mxu0 %v68
    %520 = vmatprep.subr.mxu0 %v73
    %521 = vmatpush1.msra.mxu0 %v72
    %522 = vmatprep.subr.mxu0 %v77
    %523 = vmatpush1.msra.mxu0 %v76
    %524 = vmatprep.subr.mxu0 %v81
    %525 = vmatpush1.msra.mxu0 %v80
    %526 = vmatprep.subr.mxu0 %v85
    %527 = vmatpush1.msra.mxu0 %v84
    %528 = vmatprep.subr.mxu0 %v89
    %529 = vmatpush1.msra.mxu0 %v88
    %530 = vmatprep.subr.mxu0 %v93
    %531 = vmatpush1.msra.mxu0 %v92
    %532 = vmatprep.subr.mxu0 %v97
    %533 = vmatpush1.msra.mxu0 %v96
    %534 = vmatprep.subr.mxu0 0.0
    %535 = vmatpush1.msra.mxu0 0.0
    %536 = vmatprep.subr.mxu0 0.0
    %537 = vmatpush1.msra.mxu0 0.0
    %538 = vmatprep.subr.mxu0 0.0
    %539 = vmatpush1.msra.mxu0 0.0
    %540 = vmatprep.subr.mxu0 0.0
    %541 = vmatpush1.msra.mxu0 0.0
    %542 = vmatprep.subr.mxu0 0.0
    %543 = vmatpush1.msra.mxu0 0.0
    %544 = vmatprep.subr.mxu0 0.0
    %545 = vmatpush1.msra.mxu0 0.0
    %546 = vmatprep.subr.mxu0 0.0
    %547 = vmatpush1.msra.mxu0 0.0
    %548 = vmatprep.subr.mxu0 0.0
    %549 = vmatpush1.msra.mxu0 0.0
    %550 = vmatprep.subr.mxu0 0.0
    %551 = vmatpush1.msra.mxu0 0.0
    %552 = vmatprep.subr.mxu0 0.0
    %553 = vmatpush1.msra.mxu0 0.0
    %554 = vmatprep.subr.mxu0 0.0
    %555 = vmatpush1.msra.mxu0 0.0
    %556 = vmatprep.subr.mxu0 0.0
    %557 = vmatpush1.msra.mxu0 0.0
    %558 = vmatprep.subr.mxu0 0.0
    %559 = vmatpush1.msra.mxu0 0.0
    %560 = vmatprep.subr.mxu0 0.0
    %561 = vmatpush1.msra.mxu0 0.0
    %562 = vmatprep.subr.mxu0 0.0
    %563 = vmatpush1.msra.mxu0 0.0
    %564 = vmatprep.subr.mxu0 0.0
    %565 = vmatpush1.msra.mxu0 0.0
    %566 = vmatprep.mubr.f32.mxu0 0.0
    %567 = vmatmul.mubr.f32.gmra.mrb[0].mxu0 %v430
    %v568 = vpop.f32.mrb[0].mxu0
    %v569 = vadd.f32 0.0, %v568
    %v570 = vpop.f32.mrb[0].mxu0
    %v571 = vadd.f32 0.0, %v570
    %572 = vdwg.mxu0
    %v573 = vadd.f32 %v426, %v498
    %v574 = vadd.f32 %v427, %v500
    %v575 = vadd.f32 %v428, %v569
    %v576 = vadd.f32 %v429, %v571
    %v577 = vxor.u32 %v573, 2147483648
    %v578 = vxor.u32 %v574, 2147483648
    %v579 = vxor.u32 %v575, 2147483648
    %v580 = vmul.f32 %v577, 1.442695
    %v581 = vpow.pop %v580
    %v582 = vmul.f32 %v578, 1.442695
    %v583 = vpow.pop %v582
    %v584 = vmul.f32 %v579, 1.442695
    %v585 = vpow.pop %v584
    %v586 = vadd.f32 %v581, 1.0
    %v587 = vadd.f32 %v583, 1.0
    %v588 = vadd.f32 %v585, 1.0
    %v589 = vrcp.pop %v586
    %v590 = vmul.f32 1.0, %v589
    %v591 = vrcp.pop %v587
    %v592 = vmul.f32 1.0, %v591
    %v593 = vrcp.pop %v588
    %v594 = vmul.f32 1.0, %v593
    %v595 = vtanh.pop %v576
    %v596 = vld [vmem:[#allocation4] sm:$0xff]
    %v597 = vmul.f32 %v592, %v596
    %v598 = vmul.f32 %v590, %v595
    %v599 = vadd.f32 %v597, %v598
    %600 = vst [vmem:[#allocation4] sm:$0xff] %v599
    %v601 = vtanh.pop %v599
    %v602 = vmul.f32 %v594, %v601
    %603 = vst [vmem:[#allocation3] sm:$0xff] %v602
    %s604 = scalar_lea.vmem [#allocation2], 32
    %v605 = vld [vmem:[%s604] sm:$0xff]
    %v606 = vld [vmem:[%s604 + $0x8] sm:$0xff]
    %v607 = vld [vmem:[%s604 + $0x10] sm:$0xff]
    %v608 = vld [vmem:[%s604 + $0x18] sm:$0xff]
    %v609 = vld [vmem:[#allocation3] sm:$0xff]
    %610 = vmatprep.subr.mxu0 %v35
    %611 = vmatpush1.msra.mxu0 %v34
    %612 = vmatprep.subr.mxu0 %v39
    %613 = vmatpush1.msra.mxu0 %v38
    %614 = vmatprep.subr.mxu0 %v43
    %615 = vmatpush1.msra.mxu0 %v42
    %616 = vmatprep.subr.mxu0 %v47
    %617 = vmatpush1.msra.mxu0 %v46
    %618 = vmatprep.subr.mxu0 %v51
    %619 = vmatpush1.msra.mxu0 %v50
    %620 = vmatprep.subr.mxu0 %v55
    %621 = vmatpush1.msra.mxu0 %v54
    %622 = vmatprep.subr.mxu0 %v59
    %623 = vmatpush1.msra.mxu0 %v58
    %624 = vmatprep.subr.mxu0 %v63
    %625 = vmatpush1.msra.mxu0 %v62
    %626 = vmatprep.subr.mxu0 %v67
    %627 = vmatpush1.msra.mxu0 %v66
    %628 = vmatprep.subr.mxu0 %v71
    %629 = vmatpush1.msra.mxu0 %v70
    %630 = vmatprep.subr.mxu0 %v75
    %631 = vmatpush1.msra.mxu0 %v74
    %632 = vmatprep.subr.mxu0 %v79
    %633 = vmatpush1.msra.mxu0 %v78
    %634 = vmatprep.subr.mxu0 %v83
    %635 = vmatpush1.msra.mxu0 %v82
    %636 = vmatprep.subr.mxu0 %v87
    %637 = vmatpush1.msra.mxu0 %v86
    %638 = vmatprep.subr.mxu0 %v91
    %639 = vmatpush1.msra.mxu0 %v90
    %640 = vmatprep.subr.mxu0 %v95
    %641 = vmatpush1.msra.mxu0 %v94
    %642 = vmatprep.subr.mxu0 0.0
    %643 = vmatpush1.msra.mxu0 0.0
    %644 = vmatprep.subr.mxu0 0.0
    %645 = vmatpush1.msra.mxu0 0.0
    %646 = vmatprep.subr.mxu0 0.0
    %647 = vmatpush1.msra.mxu0 0.0
    %648 = vmatprep.subr.mxu0 0.0
    %649 = vmatpush1.msra.mxu0 0.0
    %650 = vmatprep.subr.mxu0 0.0
    %651 = vmatpush1.msra.mxu0 0.0
    %652 = vmatprep.subr.mxu0 0.0
    %653 = vmatpush1.msra.mxu0 0.0
    %654 = vmatprep.subr.mxu0 0.0
    %655 = vmatpush1.msra.mxu0 0.0
    %656 = vmatprep.subr.mxu0 0.0
    %657 = vmatpush1.msra.mxu0 0.0
    %658 = vmatprep.subr.mxu0 0.0
    %659 = vmatpush1.msra.mxu0 0.0
    %660 = vmatprep.subr.mxu0 0.0
    %661 = vmatpush1.msra.mxu0 0.0
    %662 = vmatprep.subr.mxu0 0.0
    %663 = vmatpush1.msra.mxu0 0.0
    %664 = vmatprep.subr.mxu0 0.0
    %665 = vmatpush1.msra.mxu0 0.0
    %666 = vmatprep.subr.mxu0 0.0
    %667 = vmatpush1.msra.mxu0 0.0
    %668 = vmatprep.subr.mxu0 0.0
    %669 = vmatpush1.msra.mxu0 0.0
    %670 = vmatprep.subr.mxu0 0.0
    %671 = vmatpush1.msra.mxu0 0.0
    %672 = vmatprep.subr.mxu0 0.0
    %673 = vmatpush1.msra.mxu0 0.0
    %674 = vmatprep.mubr.f32.mxu0 0.0
    %675 = vmatmul.mubr.f32.gmra.mrb[0].mxu0 %v609
    %v676 = vpop.f32.mrb[0].mxu0
    %v677 = vadd.f32 0.0, %v676
    %v678 = vpop.f32.mrb[0].mxu0
    %v679 = vadd.f32 0.0, %v678
    %680 = vdwg.mxu0
    %681 = vmatprep.subr.mxu0 %v37
    %682 = vmatpush1.msra.mxu0 %v36
    %683 = vmatprep.subr.mxu0 %v41
    %684 = vmatpush1.msra.mxu0 %v40
    %685 = vmatprep.subr.mxu0 %v45
    %686 = vmatpush1.msra.mxu0 %v44
    %687 = vmatprep.subr.mxu0 %v49
    %688 = vmatpush1.msra.mxu0 %v48
    %689 = vmatprep.subr.mxu0 %v53
    %690 = vmatpush1.msra.mxu0 %v52
    %691 = vmatprep.subr.mxu0 %v57
    %692 = vmatpush1.msra.mxu0 %v56
    %693 = vmatprep.subr.mxu0 %v61
    %694 = vmatpush1.msra.mxu0 %v60
    %695 = vmatprep.subr.mxu0 %v65
    %696 = vmatpush1.msra.mxu0 %v64
    %697 = vmatprep.subr.mxu0 %v69
    %698 = vmatpush1.msra.mxu0 %v68
    %699 = vmatprep.subr.mxu0 %v73
    %700 = vmatpush1.msra.mxu0 %v72
    %701 = vmatprep.subr.mxu0 %v77
    %702 = vmatpush1.msra.mxu0 %v76
    %703 = vmatprep.subr.mxu0 %v81
    %704 = vmatpush1.msra.mxu0 %v80
    %705 = vmatprep.subr.mxu0 %v85
    %706 = vmatpush1.msra.mxu0 %v84
    %707 = vmatprep.subr.mxu0 %v89
    %708 = vmatpush1.msra.mxu0 %v88
    %709 = vmatprep.subr.mxu0 %v93
    %710 = vmatpush1.msra.mxu0 %v92
    %711 = vmatprep.subr.mxu0 %v97
    %712 = vmatpush1.msra.mxu0 %v96
    %713 = vmatprep.subr.mxu0 0.0
    %714 = vmatpush1.msra.mxu0 0.0
    %715 = vmatprep.subr.mxu0 0.0
    %716 = vmatpush1.msra.mxu0 0.0
    %717 = vmatprep.subr.mxu0 0.0
    %718 = vmatpush1.msra.mxu0 0.0
    %719 = vmatprep.subr.mxu0 0.0
    %720 = vmatpush1.msra.mxu0 0.0
    %721 = vmatprep.subr.mxu0 0.0
    %722 = vmatpush1.msra.mxu0 0.0
    %723 = vmatprep.subr.mxu0 0.0
    %724 = vmatpush1.msra.mxu0 0.0
    %725 = vmatprep.subr.mxu0 0.0
    %726 = vmatpush1.msra.mxu0 0.0
    %727 = vmatprep.subr.mxu0 0.0
    %728 = vmatpush1.msra.mxu0 0.0
    %729 = vmatprep.subr.mxu0 0.0
    %730 = vmatpush1.msra.mxu0 0.0
    %731 = vmatprep.subr.mxu0 0.0
    %732 = vmatpush1.msra.mxu0 0.0
    %733 = vmatprep.subr.mxu0 0.0
    %734 = vmatpush1.msra.mxu0 0.0
    %735 = vmatprep.subr.mxu0 0.0
    %736 = vmatpush1.msra.mxu0 0.0
    %737 = vmatprep.subr.mxu0 0.0
    %738 = vmatpush1.msra.mxu0 0.0
    %739 = vmatprep.subr.mxu0 0.0
    %740 = vmatpush1.msra.mxu0 0.0
    %741 = vmatprep.subr.mxu0 0.0
    %742 = vmatpush1.msra.mxu0 0.0
    %743 = vmatprep.subr.mxu0 0.0
    %744 = vmatpush1.msra.mxu0 0.0
    %745 = vmatprep.mubr.f32.mxu0 0.0
    %746 = vmatmul.mubr.f32.gmra.mrb[0].mxu0 %v609
    %v747 = vpop.f32.mrb[0].mxu0
    %v748 = vadd.f32 0.0, %v747
    %v749 = vpop.f32.mrb[0].mxu0
    %v750 = vadd.f32 0.0, %v749
    %751 = vdwg.mxu0
    %v752 = vadd.f32 %v605, %v677
    %v753 = vadd.f32 %v606, %v679
    %v754 = vadd.f32 %v607, %v748
    %v755 = vadd.f32 %v608, %v750
    %v756 = vxor.u32 %v752, 2147483648
    %v757 = vxor.u32 %v753, 2147483648
    %v758 = vxor.u32 %v754, 2147483648
    %v759 = vmul.f32 %v756, 1.442695
    %v760 = vpow.pop %v759
    %v761 = vmul.f32 %v757, 1.442695
    %v762 = vpow.pop %v761
    %v763 = vmul.f32 %v758, 1.442695
    %v764 = vpow.pop %v763
    %v765 = vadd.f32 %v760, 1.0
    %v766 = vadd.f32 %v762, 1.0
    %v767 = vadd.f32 %v764, 1.0
    %v768 = vrcp.pop %v765
    %v769 = vmul.f32 1.0, %v768
    %v770 = vrcp.pop %v766
    %v771 = vmul.f32 1.0, %v770
    %v772 = vrcp.pop %v767
    %v773 = vmul.f32 1.0, %v772
    %v774 = vtanh.pop %v755
    %v775 = vld [vmem:[#allocation4] sm:$0xff]
    %v776 = vmul.f32 %v771, %v775
    %v777 = vmul.f32 %v769, %v774
    %v778 = vadd.f32 %v776, %v777
    %779 = vst [vmem:[#allocation4] sm:$0xff] %v778
    %v780 = vtanh.pop %v778
    %v781 = vmul.f32 %v773, %v780
    %782 = vst [vmem:[#allocation3] sm:$0xff] %v781
    %s783 = scalar_lea.vmem [#allocation2], 64
    %v784 = vld [vmem:[%s783] sm:$0xff]
    %v785 = vld [vmem:[%s783 + $0x8] sm:$0xff]
    %v786 = vld [vmem:[%s783 + $0x10] sm:$0xff]
    %v787 = vld [vmem:[%s783 + $0x18] sm:$0xff]
    %v788 = vld [vmem:[#allocation3] sm:$0xff]
    %789 = vmatprep.subr.mxu0 %v35
    %790 = vmatpush1.msra.mxu0 %v34
    %791 = vmatprep.subr.mxu0 %v39
    %792 = vmatpush1.msra.mxu0 %v38
    %793 = vmatprep.subr.mxu0 %v43
    %794 = vmatpush1.msra.mxu0 %v42
    %795 = vmatprep.subr.mxu0 %v47
    %796 = vmatpush1.msra.mxu0 %v46
    %797 = vmatprep.subr.mxu0 %v51
    %798 = vmatpush1.msra.mxu0 %v50
    %799 = vmatprep.subr.mxu0 %v55
    %800 = vmatpush1.msra.mxu0 %v54
    %801 = vmatprep.subr.mxu0 %v59
    %802 = vmatpush1.msra.mxu0 %v58
    %803 = vmatprep.subr.mxu0 %v63
    %804 = vmatpush1.msra.mxu0 %v62
    %805 = vmatprep.subr.mxu0 %v67
    %806 = vmatpush1.msra.mxu0 %v66
    %807 = vmatprep.subr.mxu0 %v71
    %808 = vmatpush1.msra.mxu0 %v70
    %809 = vmatprep.subr.mxu0 %v75
    %810 = vmatpush1.msra.mxu0 %v74
    %811 = vmatprep.subr.mxu0 %v79
    %812 = vmatpush1.msra.mxu0 %v78
    %813 = vmatprep.subr.mxu0 %v83
    %814 = vmatpush1.msra.mxu0 %v82
    %815 = vmatprep.subr.mxu0 %v87
    %816 = vmatpush1.msra.mxu0 %v86
    %817 = vmatprep.subr.mxu0 %v91
    %818 = vmatpush1.msra.mxu0 %v90
    %819 = vmatprep.subr.mxu0 %v95
    %820 = vmatpush1.msra.mxu0 %v94
    %821 = vmatprep.subr.mxu0 0.0
    %822 = vmatpush1.msra.mxu0 0.0
    %823 = vmatprep.subr.mxu0 0.0
    %824 = vmatpush1.msra.mxu0 0.0
    %825 = vmatprep.subr.mxu0 0.0
    %826 = vmatpush1.msra.mxu0 0.0
    %827 = vmatprep.subr.mxu0 0.0
    %828 = vmatpush1.msra.mxu0 0.0
    %829 = vmatprep.subr.mxu0 0.0
    %830 = vmatpush1.msra.mxu0 0.0
    %831 = vmatprep.subr.mxu0 0.0
    %832 = vmatpush1.msra.mxu0 0.0
    %833 = vmatprep.subr.mxu0 0.0
    %834 = vmatpush1.msra.mxu0 0.0
    %835 = vmatprep.subr.mxu0 0.0
    %836 = vmatpush1.msra.mxu0 0.0
    %837 = vmatprep.subr.mxu0 0.0
    %838 = vmatpush1.msra.mxu0 0.0
    %839 = vmatprep.subr.mxu0 0.0
    %840 = vmatpush1.msra.mxu0 0.0
    %841 = vmatprep.subr.mxu0 0.0
    %842 = vmatpush1.msra.mxu0 0.0
    %843 = vmatprep.subr.mxu0 0.0
    %844 = vmatpush1.msra.mxu0 0.0
    %845 = vmatprep.subr.mxu0 0.0
    %846 = vmatpush1.msra.mxu0 0.0
    %847 = vmatprep.subr.mxu0 0.0
    %848 = vmatpush1.msra.mxu0 0.0
    %849 = vmatprep.subr.mxu0 0.0
    %850 = vmatpush1.msra.mxu0 0.0
    %851 = vmatprep.subr.mxu0 0.0
    %852 = vmatpush1.msra.mxu0 0.0
    %853 = vmatprep.mubr.f32.mxu0 0.0
    %854 = vmatmul.mubr.f32.gmra.mrb[0].mxu0 %v788
    %v855 = vpop.f32.mrb[0].mxu0
    %v856 = vadd.f32 0.0, %v855
    %v857 = vpop.f32.mrb[0].mxu0
    %v858 = vadd.f32 0.0, %v857
    %859 = vdwg.mxu0
    %860 = vmatprep.subr.mxu0 %v37
    %861 = vmatpush1.msra.mxu0 %v36
    %862 = vmatprep.subr.mxu0 %v41
    %863 = vmatpush1.msra.mxu0 %v40
    %864 = vmatprep.subr.mxu0 %v45
    %865 = vmatpush1.msra.mxu0 %v44
    %866 = vmatprep.subr.mxu0 %v49
    %867 = vmatpush1.msra.mxu0 %v48
    %868 = vmatprep.subr.mxu0 %v53
    %869 = vmatpush1.msra.mxu0 %v52
    %870 = vmatprep.subr.mxu0 %v57
    %871 = vmatpush1.msra.mxu0 %v56
    %872 = vmatprep.subr.mxu0 %v61
    %873 = vmatpush1.msra.mxu0 %v60
    %874 = vmatprep.subr.mxu0 %v65
    %875 = vmatpush1.msra.mxu0 %v64
    %876 = vmatprep.subr.mxu0 %v69
    %877 = vmatpush1.msra.mxu0 %v68
    %878 = vmatprep.subr.mxu0 %v73
    %879 = vmatpush1.msra.mxu0 %v72
    %880 = vmatprep.subr.mxu0 %v77
    %881 = vmatpush1.msra.mxu0 %v76
    %882 = vmatprep.subr.mxu0 %v81
    %883 = vmatpush1.msra.mxu0 %v80
    %884 = vmatprep.subr.mxu0 %v85
    %885 = vmatpush1.msra.mxu0 %v84
    %886 = vmatprep.subr.mxu0 %v89
    %887 = vmatpush1.msra.mxu0 %v88
    %888 = vmatprep.subr.mxu0 %v93
    %889 = vmatpush1.msra.mxu0 %v92
    %890 = vmatprep.subr.mxu0 %v97
    %891 = vmatpush1.msra.mxu0 %v96
    %892 = vmatprep.subr.mxu0 0.0
    %893 = vmatpush1.msra.mxu0 0.0
    %894 = vmatprep.subr.mxu0 0.0
    %895 = vmatpush1.msra.mxu0 0.0
    %896 = vmatprep.subr.mxu0 0.0
    %897 = vmatpush1.msra.mxu0 0.0
    %898 = vmatprep.subr.mxu0 0.0
    %899 = vmatpush1.msra.mxu0 0.0
    %900 = vmatprep.subr.mxu0 0.0
    %901 = vmatpush1.msra.mxu0 0.0
    %902 = vmatprep.subr.mxu0 0.0
    %903 = vmatpush1.msra.mxu0 0.0
    %904 = vmatprep.subr.mxu0 0.0
    %905 = vmatpush1.msra.mxu0 0.0
    %906 = vmatprep.subr.mxu0 0.0
    %907 = vmatpush1.msra.mxu0 0.0
    %908 = vmatprep.subr.mxu0 0.0
    %909 = vmatpush1.msra.mxu0 0.0
    %910 = vmatprep.subr.mxu0 0.0
    %911 = vmatpush1.msra.mxu0 0.0
    %912 = vmatprep.subr.mxu0 0.0
    %913 = vmatpush1.msra.mxu0 0.0
    %914 = vmatprep.subr.mxu0 0.0
    %915 = vmatpush1.msra.mxu0 0.0
    %916 = vmatprep.subr.mxu0 0.0
    %917 = vmatpush1.msra.mxu0 0.0
    %918 = vmatprep.subr.mxu0 0.0
    %919 = vmatpush1.msra.mxu0 0.0
    %920 = vmatprep.subr.mxu0 0.0
    %921 = vmatpush1.msra.mxu0 0.0
    %922 = vmatprep.subr.mxu0 0.0
    %923 = vmatpush1.msra.mxu0 0.0
    %924 = vmatprep.mubr.f32.mxu0 0.0
    %925 = vmatmul.mubr.f32.gmra.mrb[0].mxu0 %v788
    %v926 = vpop.f32.mrb[0].mxu0
    %v927 = vadd.f32 0.0, %v926
    %v928 = vpop.f32.mrb[0].mxu0
    %v929 = vadd.f32 0.0, %v928
    %930 = vdwg.mxu0
    %v931 = vadd.f32 %v784, %v856
    %v932 = vadd.f32 %v785, %v858
    %v933 = vadd.f32 %v786, %v927
    %v934 = vadd.f32 %v787, %v929
    %v935 = vxor.u32 %v931, 2147483648
    %v936 = vxor.u32 %v932, 2147483648
    %v937 = vxor.u32 %v933, 2147483648
    %v938 = vmul.f32 %v935, 1.442695
    %v939 = vpow.pop %v938
    %v940 = vmul.f32 %v936, 1.442695
    %v941 = vpow.pop %v940
    %v942 = vmul.f32 %v937, 1.442695
    %v943 = vpow.pop %v942
    %v944 = vadd.f32 %v939, 1.0
    %v945 = vadd.f32 %v941, 1.0
    %v946 = vadd.f32 %v943, 1.0
    %v947 = vrcp.pop %v944
    %v948 = vmul.f32 1.0, %v947
    %v949 = vrcp.pop %v945
    %v950 = vmul.f32 1.0, %v949
    %v951 = vrcp.pop %v946
    %v952 = vmul.f32 1.0, %v951
    %v953 = vtanh.pop %v934
    %v954 = vld [vmem:[#allocation4] sm:$0xff]
    %v955 = vmul.f32 %v950, %v954
    %v956 = vmul.f32 %v948, %v953
    %v957 = vadd.f32 %v955, %v956
    %958 = vst [vmem:[#allocation4] sm:$0xff] %v957
    %v959 = vtanh.pop %v957
    %v960 = vmul.f32 %v952, %v959
    %961 = vst [vmem:[#allocation3] sm:$0xff] %v960
    %s962 = scalar_lea.vmem [#allocation2], 96
    %v963 = vld [vmem:[%s962] sm:$0xff]
    %v964 = vld [vmem:[%s962 + $0x8] sm:$0xff]
    %v965 = vld [vmem:[%s962 + $0x10] sm:$0xff]
    %v966 = vld [vmem:[%s962 + $0x18] sm:$0xff]
    %v967 = vld [vmem:[#allocation3] sm:$0xff]
    %968 = vmatprep.subr.mxu0 %v35
    %969 = vmatpush1.msra.mxu0 %v34
    %970 = vmatprep.subr.mxu0 %v39
    %971 = vmatpush1.msra.mxu0 %v38
    %972 = vmatprep.subr.mxu0 %v43
    %973 = vmatpush1.msra.mxu0 %v42
    %974 = vmatprep.subr.mxu0 %v47
    %975 = vmatpush1.msra.mxu0 %v46
    %976 = vmatprep.subr.mxu0 %v51
    %977 = vmatpush1.msra.mxu0 %v50
    %978 = vmatprep.subr.mxu0 %v55
    %979 = vmatpush1.msra.mxu0 %v54
    %980 = vmatprep.subr.mxu0 %v59
    %981 = vmatpush1.msra.mxu0 %v58
    %982 = vmatprep.subr.mxu0 %v63
    %983 = vmatpush1.msra.mxu0 %v62
    %984 = vmatprep.subr.mxu0 %v67
    %985 = vmatpush1.msra.mxu0 %v66
    %986 = vmatprep.subr.mxu0 %v71
    %987 = vmatpush1.msra.mxu0 %v70
    %988 = vmatprep.subr.mxu0 %v75
    %989 = vmatpush1.msra.mxu0 %v74
    %990 = vmatprep.subr.mxu0 %v79
    %991 = vmatpush1.msra.mxu0 %v78
    %992 = vmatprep.subr.mxu0 %v83
    %993 = vmatpush1.msra.mxu0 %v82
    %994 = vmatprep.subr.mxu0 %v87
    %995 = vmatpush1.msra.mxu0 %v86
    %996 = vmatprep.subr.mxu0 %v91
    %997 = vmatpush1.msra.mxu0 %v90
    %998 = vmatprep.subr.mxu0 %v95
    %999 = vmatpush1.msra.mxu0 %v94
    %1000 = vmatprep.subr.mxu0 0.0
    %1001 = vmatpush1.msra.mxu0 0.0
    %1002 = vmatprep.subr.mxu0 0.0
    %1003 = vmatpush1.msra.mxu0 0.0
    %1004 = vmatprep.subr.mxu0 0.0
    %1005 = vmatpush1.msra.mxu0 0.0
    %1006 = vmatprep.subr.mxu0 0.0
    %1007 = vmatpush1.msra.mxu0 0.0
    %1008 = vmatprep.subr.mxu0 0.0
    %1009 = vmatpush1.msra.mxu0 0.0
    %1010 = vmatprep.subr.mxu0 0.0
    %1011 = vmatpush1.msra.mxu0 0.0
    %1012 = vmatprep.subr.mxu0 0.0
    %1013 = vmatpush1.msra.mxu0 0.0
    %1014 = vmatprep.subr.mxu0 0.0
    %1015 = vmatpush1.msra.mxu0 0.0
    %1016 = vmatprep.subr.mxu0 0.0
    %1017 = vmatpush1.msra.mxu0 0.0
    %1018 = vmatprep.subr.mxu0 0.0
    %1019 = vmatpush1.msra.mxu0 0.0
    %1020 = vmatprep.subr.mxu0 0.0
    %1021 = vmatpush1.msra.mxu0 0.0
    %1022 = vmatprep.subr.mxu0 0.0
    %1023 = vmatpush1.msra.mxu0 0.0
    %1024 = vmatprep.subr.mxu0 0.0
    %1025 = vmatpush1.msra.mxu0 0.0
    %1026 = vmatprep.subr.mxu0 0.0
    %1027 = vmatpush1.msra.mxu0 0.0
    %1028 = vmatprep.subr.mxu0 0.0
    %1029 = vmatpush1.msra.mxu0 0.0
    %1030 = vmatprep.subr.mxu0 0.0
    %1031 = vmatpush1.msra.mxu0 0.0
    %1032 = vmatprep.mubr.f32.mxu0 0.0
    %1033 = vmatmul.mubr.f32.gmra.mrb[0].mxu0 %v967
    %v1034 = vpop.f32.mrb[0].mxu0
    %v1035 = vadd.f32 0.0, %v1034
    %v1036 = vpop.f32.mrb[0].mxu0
    %v1037 = vadd.f32 0.0, %v1036
    %1038 = vdwg.mxu0
    %1039 = vmatprep.subr.mxu0 %v37
    %1040 = vmatpush1.msra.mxu0 %v36
    %1041 = vmatprep.subr.mxu0 %v41
    %1042 = vmatpush1.msra.mxu0 %v40
    %1043 = vmatprep.subr.mxu0 %v45
    %1044 = vmatpush1.msra.mxu0 %v44
    %1045 = vmatprep.subr.mxu0 %v49
    %1046 = vmatpush1.msra.mxu0 %v48
    %1047 = vmatprep.subr.mxu0 %v53
    %1048 = vmatpush1.msra.mxu0 %v52
    %1049 = vmatprep.subr.mxu0 %v57
    %1050 = vmatpush1.msra.mxu0 %v56
    %1051 = vmatprep.subr.mxu0 %v61
    %1052 = vmatpush1.msra.mxu0 %v60
    %1053 = vmatprep.subr.mxu0 %v65
    %1054 = vmatpush1.msra.mxu0 %v64
    %1055 = vmatprep.subr.mxu0 %v69
    %1056 = vmatpush1.msra.mxu0 %v68
    %1057 = vmatprep.subr.mxu0 %v73
    %1058 = vmatpush1.msra.mxu0 %v72
    %1059 = vmatprep.subr.mxu0 %v77
    %1060 = vmatpush1.msra.mxu0 %v76
    %1061 = vmatprep.subr.mxu0 %v81
    %1062 = vmatpush1.msra.mxu0 %v80
    %1063 = vmatprep.subr.mxu0 %v85
    %1064 = vmatpush1.msra.mxu0 %v84
    %1065 = vmatprep.subr.mxu0 %v89
    %1066 = vmatpush1.msra.mxu0 %v88
    %1067 = vmatprep.subr.mxu0 %v93
    %1068 = vmatpush1.msra.mxu0 %v92
    %1069 = vmatprep.subr.mxu0 %v97
    %1070 = vmatpush1.msra.mxu0 %v96
    %1071 = vmatprep.subr.mxu0 0.0
    %1072 = vmatpush1.msra.mxu0 0.0
    %1073 = vmatprep.subr.mxu0 0.0
    %1074 = vmatpush1.msra.mxu0 0.0
    %1075 = vmatprep.subr.mxu0 0.0
    %1076 = vmatpush1.msra.mxu0 0.0
    %1077 = vmatprep.subr.mxu0 0.0
    %1078 = vmatpush1.msra.mxu0 0.0
    %1079 = vmatprep.subr.mxu0 0.0
    %1080 = vmatpush1.msra.mxu0 0.0
    %1081 = vmatprep.subr.mxu0 0.0
    %1082 = vmatpush1.msra.mxu0 0.0
    %1083 = vmatprep.subr.mxu0 0.0
    %1084 = vmatpush1.msra.mxu0 0.0
    %1085 = vmatprep.subr.mxu0 0.0
    %1086 = vmatpush1.msra.mxu0 0.0
    %1087 = vmatprep.subr.mxu0 0.0
    %1088 = vmatpush1.msra.mxu0 0.0
    %1089 = vmatprep.subr.mxu0 0.0
    %1090 = vmatpush1.msra.mxu0 0.0
    %1091 = vmatprep.subr.mxu0 0.0
    %1092 = vmatpush1.msra.mxu0 0.0
    %1093 = vmatprep.subr.mxu0 0.0
    %1094 = vmatpush1.msra.mxu0 0.0
    %1095 = vmatprep.subr.mxu0 0.0
    %1096 = vmatpush1.msra.mxu0 0.0
    %1097 = vmatprep.subr.mxu0 0.0
    %1098 = vmatpush1.msra.mxu0 0.0
    %1099 = vmatprep.subr.mxu0 0.0
    %1100 = vmatpush1.msra.mxu0 0.0
    %1101 = vmatprep.subr.mxu0 0.0
    %1102 = vmatpush1.msra.mxu0 0.0
    %1103 = vmatprep.mubr.f32.mxu0 0.0
    %1104 = vmatmul.mubr.f32.gmra.mrb[0].mxu0 %v967
    %v1105 = vpop.f32.mrb[0].mxu0
    %v1106 = vadd.f32 0.0, %v1105
    %v1107 = vpop.f32.mrb[0].mxu0
    %v1108 = vadd.f32 0.0, %v1107
    %1109 = vdwg.mxu0
    %v1110 = vadd.f32 %v963, %v1035
    %v1111 = vadd.f32 %v964, %v1037
    %v1112 = vadd.f32 %v965, %v1106
    %v1113 = vadd.f32 %v966, %v1108
    %v1114 = vxor.u32 %v1110, 2147483648
    %v1115 = vxor.u32 %v1111, 2147483648
    %v1116 = vxor.u32 %v1112, 2147483648
    %v1117 = vmul.f32 %v1114, 1.442695
    %v1118 = vpow.pop %v1117
    %v1119 = vmul.f32 %v1115, 1.442695
    %v1120 = vpow.pop %v1119
    %v1121 = vmul.f32 %v1116, 1.442695
    %v1122 = vpow.pop %v1121
    %v1123 = vadd.f32 %v1118, 1.0
    %v1124 = vadd.f32 %v1120, 1.0
    %v1125 = vadd.f32 %v1122, 1.0
    %v1126 = vrcp.pop %v1123
    %v1127 = vmul.f32 1.0, %v1126
    %v1128 = vrcp.pop %v1124
    %v1129 = vmul.f32 1.0, %v1128
    %v1130 = vrcp.pop %v1125
    %v1131 = vmul.f32 1.0, %v1130
    %v1132 = vtanh.pop %v1113
    %v1133 = vld [vmem:[#allocation4] sm:$0xff]
    %v1134 = vmul.f32 %v1129, %v1133
    %v1135 = vmul.f32 %v1127, %v1132
    %v1136 = vadd.f32 %v1134, %v1135
    %1137 = vst [vmem:[#allocation4] sm:$0xff] %v1136
    %v1138 = vtanh.pop %v1136
    %v1139 = vmul.f32 %v1131, %v1138
    %1140 = vst [vmem:[#allocation3] sm:$0xff] %v1139
    %s1141 = scalar_lea.vmem [#allocation2], 128
    %v1142 = vld [vmem:[%s1141] sm:$0xff]
    %v1143 = vld [vmem:[%s1141 + $0x8] sm:$0xff]
    %v1144 = vld [vmem:[%s1141 + $0x10] sm:$0xff]
    %v1145 = vld [vmem:[%s1141 + $0x18] sm:$0xff]
    %v1146 = vld [vmem:[#allocation3] sm:$0xff]
    %1147 = vmatprep.subr.mxu0 %v35
    %1148 = vmatpush1.msra.mxu0 %v34
    %1149 = vmatprep.subr.mxu0 %v39
    %1150 = vmatpush1.msra.mxu0 %v38
    %1151 = vmatprep.subr.mxu0 %v43
    %1152 = vmatpush1.msra.mxu0 %v42
    %1153 = vmatprep.subr.mxu0 %v47
    %1154 = vmatpush1.msra.mxu0 %v46
    %1155 = vmatprep.subr.mxu0 %v51
    %1156 = vmatpush1.msra.mxu0 %v50
    %1157 = vmatprep.subr.mxu0 %v55
    %1158 = vmatpush1.msra.mxu0 %v54
    %1159 = vmatprep.subr.mxu0 %v59
    %1160 = vmatpush1.msra.mxu0 %v58
    %1161 = vmatprep.subr.mxu0 %v63
    %1162 = vmatpush1.msra.mxu0 %v62
    %1163 = vmatprep.subr.mxu0 %v67
    %1164 = vmatpush1.msra.mxu0 %v66
    %1165 = vmatprep.subr.mxu0 %v71
    %1166 = vmatpush1.msra.mxu0 %v70
    %1167 = vmatprep.subr.mxu0 %v75
    %1168 = vmatpush1.msra.mxu0 %v74
    %1169 = vmatprep.subr.mxu0 %v79
    %1170 = vmatpush1.msra.mxu0 %v78
    %1171 = vmatprep.subr.mxu0 %v83
    %1172 = vmatpush1.msra.mxu0 %v82
    %1173 = vmatprep.subr.mxu0 %v87
    %1174 = vmatpush1.msra.mxu0 %v86
    %1175 = vmatprep.subr.mxu0 %v91
    %1176 = vmatpush1.msra.mxu0 %v90
    %1177 = vmatprep.subr.mxu0 %v95
    %1178 = vmatpush1.msra.mxu0 %v94
    %1179 = vmatprep.subr.mxu0 0.0
    %1180 = vmatpush1.msra.mxu0 0.0
    %1181 = vmatprep.subr.mxu0 0.0
    %1182 = vmatpush1.msra.mxu0 0.0
    %1183 = vmatprep.subr.mxu0 0.0
    %1184 = vmatpush1.msra.mxu0 0.0
    %1185 = vmatprep.subr.mxu0 0.0
    %1186 = vmatpush1.msra.mxu0 0.0
    %1187 = vmatprep.subr.mxu0 0.0
    %1188 = vmatpush1.msra.mxu0 0.0
    %1189 = vmatprep.subr.mxu0 0.0
    %1190 = vmatpush1.msra.mxu0 0.0
    %1191 = vmatprep.subr.mxu0 0.0
    %1192 = vmatpush1.msra.mxu0 0.0
    %1193 = vmatprep.subr.mxu0 0.0
    %1194 = vmatpush1.msra.mxu0 0.0
    %1195 = vmatprep.subr.mxu0 0.0
    %1196 = vmatpush1.msra.mxu0 0.0
    %1197 = vmatprep.subr.mxu0 0.0
    %1198 = vmatpush1.msra.mxu0 0.0
    %1199 = vmatprep.subr.mxu0 0.0
    %1200 = vmatpush1.msra.mxu0 0.0
    %1201 = vmatprep.subr.mxu0 0.0
    %1202 = vmatpush1.msra.mxu0 0.0
    %1203 = vmatprep.subr.mxu0 0.0
    %1204 = vmatpush1.msra.mxu0 0.0
    %1205 = vmatprep.subr.mxu0 0.0
    %1206 = vmatpush1.msra.mxu0 0.0
    %1207 = vmatprep.subr.mxu0 0.0
    %1208 = vmatpush1.msra.mxu0 0.0
    %1209 = vmatprep.subr.mxu0 0.0
    %1210 = vmatpush1.msra.mxu0 0.0
    %1211 = vmatprep.mubr.f32.mxu0 0.0
    %1212 = vmatmul.mubr.f32.gmra.mrb[0].mxu0 %v1146
    %v1213 = vpop.f32.mrb[0].mxu0
    %v1214 = vadd.f32 0.0, %v1213
    %v1215 = vpop.f32.mrb[0].mxu0
    %v1216 = vadd.f32 0.0, %v1215
    %1217 = vdwg.mxu0
    %1218 = vmatprep.subr.mxu0 %v37
    %1219 = vmatpush1.msra.mxu0 %v36
    %1220 = vmatprep.subr.mxu0 %v41
    %1221 = vmatpush1.msra.mxu0 %v40
    %1222 = vmatprep.subr.mxu0 %v45
    %1223 = vmatpush1.msra.mxu0 %v44
    %1224 = vmatprep.subr.mxu0 %v49
    %1225 = vmatpush1.msra.mxu0 %v48
    %1226 = vmatprep.subr.mxu0 %v53
    %1227 = vmatpush1.msra.mxu0 %v52
    %1228 = vmatprep.subr.mxu0 %v57
    %1229 = vmatpush1.msra.mxu0 %v56
    %1230 = vmatprep.subr.mxu0 %v61
    %1231 = vmatpush1.msra.mxu0 %v60
    %1232 = vmatprep.subr.mxu0 %v65
    %1233 = vmatpush1.msra.mxu0 %v64
    %1234 = vmatprep.subr.mxu0 %v69
    %1235 = vmatpush1.msra.mxu0 %v68
    %1236 = vmatprep.subr.mxu0 %v73
    %1237 = vmatpush1.msra.mxu0 %v72
    %1238 = vmatprep.subr.mxu0 %v77
    %1239 = vmatpush1.msra.mxu0 %v76
    %1240 = vmatprep.subr.mxu0 %v81
    %1241 = vmatpush1.msra.mxu0 %v80
    %1242 = vmatprep.subr.mxu0 %v85
    %1243 = vmatpush1.msra.mxu0 %v84
    %1244 = vmatprep.subr.mxu0 %v89
    %1245 = vmatpush1.msra.mxu0 %v88
    %1246 = vmatprep.subr.mxu0 %v93
    %1247 = vmatpush1.msra.mxu0 %v92
    %1248 = vmatprep.subr.mxu0 %v97
    %1249 = vmatpush1.msra.mxu0 %v96
    %1250 = vmatprep.subr.mxu0 0.0
    %1251 = vmatpush1.msra.mxu0 0.0
    %1252 = vmatprep.subr.mxu0 0.0
    %1253 = vmatpush1.msra.mxu0 0.0
    %1254 = vmatprep.subr.mxu0 0.0
    %1255 = vmatpush1.msra.mxu0 0.0
    %1256 = vmatprep.subr.mxu0 0.0
    %1257 = vmatpush1.msra.mxu0 0.0
    %1258 = vmatprep.subr.mxu0 0.0
    %1259 = vmatpush1.msra.mxu0 0.0
    %1260 = vmatprep.subr.mxu0 0.0
    %1261 = vmatpush1.msra.mxu0 0.0
    %1262 = vmatprep.subr.mxu0 0.0
    %1263 = vmatpush1.msra.mxu0 0.0
    %1264 = vmatprep.subr.mxu0 0.0
    %1265 = vmatpush1.msra.mxu0 0.0
    %1266 = vmatprep.subr.mxu0 0.0
    %1267 = vmatpush1.msra.mxu0 0.0
    %1268 = vmatprep.subr.mxu0 0.0
    %1269 = vmatpush1.msra.mxu0 0.0
    %1270 = vmatprep.subr.mxu0 0.0
    %1271 = vmatpush1.msra.mxu0 0.0
    %1272 = vmatprep.subr.mxu0 0.0
    %1273 = vmatpush1.msra.mxu0 0.0
    %1274 = vmatprep.subr.mxu0 0.0
    %1275 = vmatpush1.msra.mxu0 0.0
    %1276 = vmatprep.subr.mxu0 0.0
    %1277 = vmatpush1.msra.mxu0 0.0
    %1278 = vmatprep.subr.mxu0 0.0
    %1279 = vmatpush1.msra.mxu0 0.0
    %1280 = vmatprep.subr.mxu0 0.0
    %1281 = vmatpush1.msra.mxu0 0.0
    %1282 = vmatprep.mubr.f32.mxu0 0.0
    %1283 = vmatmul.mubr.f32.gmra.mrb[0].mxu0 %v1146
    %v1284 = vpop.f32.mrb[0].mxu0
    %v1285 = vadd.f32 0.0, %v1284
    %v1286 = vpop.f32.mrb[0].mxu0
    %v1287 = vadd.f32 0.0, %v1286
    %1288 = vdwg.mxu0
    %v1289 = vadd.f32 %v1142, %v1214
    %v1290 = vadd.f32 %v1143, %v1216
    %v1291 = vadd.f32 %v1144, %v1285
    %v1292 = vadd.f32 %v1145, %v1287
    %v1293 = vxor.u32 %v1289, 2147483648
    %v1294 = vxor.u32 %v1290, 2147483648
    %v1295 = vxor.u32 %v1291, 2147483648
    %v1296 = vmul.f32 %v1293, 1.442695
    %v1297 = vpow.pop %v1296
    %v1298 = vmul.f32 %v1294, 1.442695
    %v1299 = vpow.pop %v1298
    %v1300 = vmul.f32 %v1295, 1.442695
    %v1301 = vpow.pop %v1300
    %v1302 = vadd.f32 %v1297, 1.0
    %v1303 = vadd.f32 %v1299, 1.0
    %v1304 = vadd.f32 %v1301, 1.0
    %v1305 = vrcp.pop %v1302
    %v1306 = vmul.f32 1.0, %v1305
    %v1307 = vrcp.pop %v1303
    %v1308 = vmul.f32 1.0, %v1307
    %v1309 = vrcp.pop %v1304
    %v1310 = vmul.f32 1.0, %v1309
    %v1311 = vtanh.pop %v1292
    %v1312 = vld [vmem:[#allocation4] sm:$0xff]
    %v1313 = vmul.f32 %v1308, %v1312
    %v1314 = vmul.f32 %v1306, %v1311
    %v1315 = vadd.f32 %v1313, %v1314
    %1316 = vst [vmem:[#allocation4] sm:$0xff] %v1315
    %v1317 = vtanh.pop %v1315
    %v1318 = vmul.f32 %v1310, %v1317
    %1319 = vst [vmem:[#allocation3] sm:$0xff] %v1318
    %s1320 = scalar_lea.vmem [#allocation2], 160
    %v1321 = vld [vmem:[%s1320] sm:$0xff]
    %v1322 = vld [vmem:[%s1320 + $0x8] sm:$0xff]
    %v1323 = vld [vmem:[%s1320 + $0x10] sm:$0xff]
    %v1324 = vld [vmem:[%s1320 + $0x18] sm:$0xff]
    %v1325 = vld [vmem:[#allocation3] sm:$0xff]
    %1326 = vmatprep.subr.mxu0 %v35
    %1327 = vmatpush1.msra.mxu0 %v34
    %1328 = vmatprep.subr.mxu0 %v39
    %1329 = vmatpush1.msra.mxu0 %v38
    %1330 = vmatprep.subr.mxu0 %v43
    %1331 = vmatpush1.msra.mxu0 %v42
    %1332 = vmatprep.subr.mxu0 %v47
    %1333 = vmatpush1.msra.mxu0 %v46
    %1334 = vmatprep.subr.mxu0 %v51
    %1335 = vmatpush1.msra.mxu0 %v50
    %1336 = vmatprep.subr.mxu0 %v55
    %1337 = vmatpush1.msra.mxu0 %v54
    %1338 = vmatprep.subr.mxu0 %v59
    %1339 = vmatpush1.msra.mxu0 %v58
    %1340 = vmatprep.subr.mxu0 %v63
    %1341 = vmatpush1.msra.mxu0 %v62
    %1342 = vmatprep.subr.mxu0 %v67
    %1343 = vmatpush1.msra.mxu0 %v66
    %1344 = vmatprep.subr.mxu0 %v71
    %1345 = vmatpush1.msra.mxu0 %v70
    %1346 = vmatprep.subr.mxu0 %v75
    %1347 = vmatpush1.msra.mxu0 %v74
    %1348 = vmatprep.subr.mxu0 %v79
    %1349 = vmatpush1.msra.mxu0 %v78
    %1350 = vmatprep.subr.mxu0 %v83
    %1351 = vmatpush1.msra.mxu0 %v82
    %1352 = vmatprep.subr.mxu0 %v87
    %1353 = vmatpush1.msra.mxu0 %v86
    %1354 = vmatprep.subr.mxu0 %v91
    %1355 = vmatpush1.msra.mxu0 %v90
    %1356 = vmatprep.subr.mxu0 %v95
    %1357 = vmatpush1.msra.mxu0 %v94
    %1358 = vmatprep.subr.mxu0 0.0
    %1359 = vmatpush1.msra.mxu0 0.0
    %1360 = vmatprep.subr.mxu0 0.0
    %1361 = vmatpush1.msra.mxu0 0.0
    %1362 = vmatprep.subr.mxu0 0.0
    %1363 = vmatpush1.msra.mxu0 0.0
    %1364 = vmatprep.subr.mxu0 0.0
    %1365 = vmatpush1.msra.mxu0 0.0
    %1366 = vmatprep.subr.mxu0 0.0
    %1367 = vmatpush1.msra.mxu0 0.0
    %1368 = vmatprep.subr.mxu0 0.0
    %1369 = vmatpush1.msra.mxu0 0.0
    %1370 = vmatprep.subr.mxu0 0.0
    %1371 = vmatpush1.msra.mxu0 0.0
    %1372 = vmatprep.subr.mxu0 0.0
    %1373 = vmatpush1.msra.mxu0 0.0
    %1374 = vmatprep.subr.mxu0 0.0
    %1375 = vmatpush1.msra.mxu0 0.0
    %1376 = vmatprep.subr.mxu0 0.0
    %1377 = vmatpush1.msra.mxu0 0.0
    %1378 = vmatprep.subr.mxu0 0.0
    %1379 = vmatpush1.msra.mxu0 0.0
    %1380 = vmatprep.subr.mxu0 0.0
    %1381 = vmatpush1.msra.mxu0 0.0
    %1382 = vmatprep.subr.mxu0 0.0
    %1383 = vmatpush1.msra.mxu0 0.0
    %1384 = vmatprep.subr.mxu0 0.0
    %1385 = vmatpush1.msra.mxu0 0.0
    %1386 = vmatprep.subr.mxu0 0.0
    %1387 = vmatpush1.msra.mxu0 0.0
    %1388 = vmatprep.subr.mxu0 0.0
    %1389 = vmatpush1.msra.mxu0 0.0
    %1390 = vmatprep.mubr.f32.mxu0 0.0
    %1391 = vmatmul.mubr.f32.gmra.mrb[0].mxu0 %v1325
    %v1392 = vpop.f32.mrb[0].mxu0
    %v1393 = vadd.f32 0.0, %v1392
    %v1394 = vpop.f32.mrb[0].mxu0
    %v1395 = vadd.f32 0.0, %v1394
    %1396 = vdwg.mxu0
    %1397 = vmatprep.subr.mxu0 %v37
    %1398 = vmatpush1.msra.mxu0 %v36
    %1399 = vmatprep.subr.mxu0 %v41
    %1400 = vmatpush1.msra.mxu0 %v40
    %1401 = vmatprep.subr.mxu0 %v45
    %1402 = vmatpush1.msra.mxu0 %v44
    %1403 = vmatprep.subr.mxu0 %v49
    %1404 = vmatpush1.msra.mxu0 %v48
    %1405 = vmatprep.subr.mxu0 %v53
    %1406 = vmatpush1.msra.mxu0 %v52
    %1407 = vmatprep.subr.mxu0 %v57
    %1408 = vmatpush1.msra.mxu0 %v56
    %1409 = vmatprep.subr.mxu0 %v61
    %1410 = vmatpush1.msra.mxu0 %v60
    %1411 = vmatprep.subr.mxu0 %v65
    %1412 = vmatpush1.msra.mxu0 %v64
    %1413 = vmatprep.subr.mxu0 %v69
    %1414 = vmatpush1.msra.mxu0 %v68
    %1415 = vmatprep.subr.mxu0 %v73
    %1416 = vmatpush1.msra.mxu0 %v72
    %1417 = vmatprep.subr.mxu0 %v77
    %1418 = vmatpush1.msra.mxu0 %v76
    %1419 = vmatprep.subr.mxu0 %v81
    %1420 = vmatpush1.msra.mxu0 %v80
    %1421 = vmatprep.subr.mxu0 %v85
    %1422 = vmatpush1.msra.mxu0 %v84
    %1423 = vmatprep.subr.mxu0 %v89
    %1424 = vmatpush1.msra.mxu0 %v88
    %1425 = vmatprep.subr.mxu0 %v93
    %1426 = vmatpush1.msra.mxu0 %v92
    %1427 = vmatprep.subr.mxu0 %v97
    %1428 = vmatpush1.msra.mxu0 %v96
    %1429 = vmatprep.subr.mxu0 0.0
    %1430 = vmatpush1.msra.mxu0 0.0
    %1431 = vmatprep.subr.mxu0 0.0
    %1432 = vmatpush1.msra.mxu0 0.0
    %1433 = vmatprep.subr.mxu0 0.0
    %1434 = vmatpush1.msra.mxu0 0.0
    %1435 = vmatprep.subr.mxu0 0.0
    %1436 = vmatpush1.msra.mxu0 0.0
    %1437 = vmatprep.subr.mxu0 0.0
    %1438 = vmatpush1.msra.mxu0 0.0
    %1439 = vmatprep.subr.mxu0 0.0
    %1440 = vmatpush1.msra.mxu0 0.0
    %1441 = vmatprep.subr.mxu0 0.0
    %1442 = vmatpush1.msra.mxu0 0.0
    %1443 = vmatprep.subr.mxu0 0.0
    %1444 = vmatpush1.msra.mxu0 0.0
    %1445 = vmatprep.subr.mxu0 0.0
    %1446 = vmatpush1.msra.mxu0 0.0
    %1447 = vmatprep.subr.mxu0 0.0
    %1448 = vmatpush1.msra.mxu0 0.0
    %1449 = vmatprep.subr.mxu0 0.0
    %1450 = vmatpush1.msra.mxu0 0.0
    %1451 = vmatprep.subr.mxu0 0.0
    %1452 = vmatpush1.msra.mxu0 0.0
    %1453 = vmatprep.subr.mxu0 0.0
    %1454 = vmatpush1.msra.mxu0 0.0
    %1455 = vmatprep.subr.mxu0 0.0
    %1456 = vmatpush1.msra.mxu0 0.0
    %1457 = vmatprep.subr.mxu0 0.0
    %1458 = vmatpush1.msra.mxu0 0.0
    %1459 = vmatprep.subr.mxu0 0.0
    %1460 = vmatpush1.msra.mxu0 0.0
    %1461 = vmatprep.mubr.f32.mxu0 0.0
    %1462 = vmatmul.mubr.f32.gmra.mrb[0].mxu0 %v1325
    %v1463 = vpop.f32.mrb[0].mxu0
    %v1464 = vadd.f32 0.0, %v1463
    %v1465 = vpop.f32.mrb[0].mxu0
    %v1466 = vadd.f32 0.0, %v1465
    %1467 = vdwg.mxu0
    %v1468 = vadd.f32 %v1321, %v1393
    %v1469 = vadd.f32 %v1322, %v1395
    %v1470 = vadd.f32 %v1323, %v1464
    %v1471 = vadd.f32 %v1324, %v1466
    %v1472 = vxor.u32 %v1468, 2147483648
    %v1473 = vxor.u32 %v1469, 2147483648
    %v1474 = vxor.u32 %v1470, 2147483648
    %v1475 = vmul.f32 %v1472, 1.442695
    %v1476 = vpow.pop %v1475
    %v1477 = vmul.f32 %v1473, 1.442695
    %v1478 = vpow.pop %v1477
    %v1479 = vmul.f32 %v1474, 1.442695
    %v1480 = vpow.pop %v1479
    %v1481 = vadd.f32 %v1476, 1.0
    %v1482 = vadd.f32 %v1478, 1.0
    %v1483 = vadd.f32 %v1480, 1.0
    %v1484 = vrcp.pop %v1481
    %v1485 = vmul.f32 1.0, %v1484
    %v1486 = vrcp.pop %v1482
    %v1487 = vmul.f32 1.0, %v1486
    %v1488 = vrcp.pop %v1483
    %v1489 = vmul.f32 1.0, %v1488
    %v1490 = vtanh.pop %v1471
    %v1491 = vld [vmem:[#allocation4] sm:$0xff]
    %v1492 = vmul.f32 %v1487, %v1491
    %v1493 = vmul.f32 %v1485, %v1490
    %v1494 = vadd.f32 %v1492, %v1493
    %1495 = vst [vmem:[#allocation4] sm:$0xff] %v1494
    %v1496 = vtanh.pop %v1494
    %v1497 = vmul.f32 %v1489, %v1496
    %1498 = vst [vmem:[#allocation3] sm:$0xff] %v1497
    %s1499 = scalar_lea.vmem [#allocation2], 192
    %v1500 = vld [vmem:[%s1499] sm:$0xff]
    %v1501 = vld [vmem:[%s1499 + $0x8] sm:$0xff]
    %v1502 = vld [vmem:[%s1499 + $0x10] sm:$0xff]
    %v1503 = vld [vmem:[%s1499 + $0x18] sm:$0xff]
    %v1504 = vld [vmem:[#allocation3] sm:$0xff]
    %1505 = vmatprep.subr.mxu0 %v35
    %1506 = vmatpush1.msra.mxu0 %v34
    %1507 = vmatprep.subr.mxu0 %v39
    %1508 = vmatpush1.msra.mxu0 %v38
    %1509 = vmatprep.subr.mxu0 %v43
    %1510 = vmatpush1.msra.mxu0 %v42
    %1511 = vmatprep.subr.mxu0 %v47
    %1512 = vmatpush1.msra.mxu0 %v46
    %1513 = vmatprep.subr.mxu0 %v51
    %1514 = vmatpush1.msra.mxu0 %v50
    %1515 = vmatprep.subr.mxu0 %v55
    %1516 = vmatpush1.msra.mxu0 %v54
    %1517 = vmatprep.subr.mxu0 %v59
    %1518 = vmatpush1.msra.mxu0 %v58
    %1519 = vmatprep.subr.mxu0 %v63
    %1520 = vmatpush1.msra.mxu0 %v62
    %1521 = vmatprep.subr.mxu0 %v67
    %1522 = vmatpush1.msra.mxu0 %v66
    %1523 = vmatprep.subr.mxu0 %v71
    %1524 = vmatpush1.msra.mxu0 %v70
    %1525 = vmatprep.subr.mxu0 %v75
    %1526 = vmatpush1.msra.mxu0 %v74
    %1527 = vmatprep.subr.mxu0 %v79
    %1528 = vmatpush1.msra.mxu0 %v78
    %1529 = vmatprep.subr.mxu0 %v83
    %1530 = vmatpush1.msra.mxu0 %v82
    %1531 = vmatprep.subr.mxu0 %v87
    %1532 = vmatpush1.msra.mxu0 %v86
    %1533 = vmatprep.subr.mxu0 %v91
    %1534 = vmatpush1.msra.mxu0 %v90
    %1535 = vmatprep.subr.mxu0 %v95
    %1536 = vmatpush1.msra.mxu0 %v94
    %1537 = vmatprep.subr.mxu0 0.0
    %1538 = vmatpush1.msra.mxu0 0.0
    %1539 = vmatprep.subr.mxu0 0.0
    %1540 = vmatpush1.msra.mxu0 0.0
    %1541 = vmatprep.subr.mxu0 0.0
    %1542 = vmatpush1.msra.mxu0 0.0
    %1543 = vmatprep.subr.mxu0 0.0
    %1544 = vmatpush1.msra.mxu0 0.0
    %1545 = vmatprep.subr.mxu0 0.0
    %1546 = vmatpush1.msra.mxu0 0.0
    %1547 = vmatprep.subr.mxu0 0.0
    %1548 = vmatpush1.msra.mxu0 0.0
    %1549 = vmatprep.subr.mxu0 0.0
    %1550 = vmatpush1.msra.mxu0 0.0
    %1551 = vmatprep.subr.mxu0 0.0
    %1552 = vmatpush1.msra.mxu0 0.0
    %1553 = vmatprep.subr.mxu0 0.0
    %1554 = vmatpush1.msra.mxu0 0.0
    %1555 = vmatprep.subr.mxu0 0.0
    %1556 = vmatpush1.msra.mxu0 0.0
    %1557 = vmatprep.subr.mxu0 0.0
    %1558 = vmatpush1.msra.mxu0 0.0
    %1559 = vmatprep.subr.mxu0 0.0
    %1560 = vmatpush1.msra.mxu0 0.0
    %1561 = vmatprep.subr.mxu0 0.0
    %1562 = vmatpush1.msra.mxu0 0.0
    %1563 = vmatprep.subr.mxu0 0.0
    %1564 = vmatpush1.msra.mxu0 0.0
    %1565 = vmatprep.subr.mxu0 0.0
    %1566 = vmatpush1.msra.mxu0 0.0
    %1567 = vmatprep.subr.mxu0 0.0
    %1568 = vmatpush1.msra.mxu0 0.0
    %1569 = vmatprep.mubr.f32.mxu0 0.0
    %1570 = vmatmul.mubr.f32.gmra.mrb[0].mxu0 %v1504
    %v1571 = vpop.f32.mrb[0].mxu0
    %v1572 = vadd.f32 0.0, %v1571
    %v1573 = vpop.f32.mrb[0].mxu0
    %v1574 = vadd.f32 0.0, %v1573
    %1575 = vdwg.mxu0
    %1576 = vmatprep.subr.mxu0 %v37
    %1577 = vmatpush1.msra.mxu0 %v36
    %1578 = vmatprep.subr.mxu0 %v41
    %1579 = vmatpush1.msra.mxu0 %v40
    %1580 = vmatprep.subr.mxu0 %v45
    %1581 = vmatpush1.msra.mxu0 %v44
    %1582 = vmatprep.subr.mxu0 %v49
    %1583 = vmatpush1.msra.mxu0 %v48
    %1584 = vmatprep.subr.mxu0 %v53
    %1585 = vmatpush1.msra.mxu0 %v52
    %1586 = vmatprep.subr.mxu0 %v57
    %1587 = vmatpush1.msra.mxu0 %v56
    %1588 = vmatprep.subr.mxu0 %v61
    %1589 = vmatpush1.msra.mxu0 %v60
    %1590 = vmatprep.subr.mxu0 %v65
    %1591 = vmatpush1.msra.mxu0 %v64
    %1592 = vmatprep.subr.mxu0 %v69
    %1593 = vmatpush1.msra.mxu0 %v68
    %1594 = vmatprep.subr.mxu0 %v73
    %1595 = vmatpush1.msra.mxu0 %v72
    %1596 = vmatprep.subr.mxu0 %v77
    %1597 = vmatpush1.msra.mxu0 %v76
    %1598 = vmatprep.subr.mxu0 %v81
    %1599 = vmatpush1.msra.mxu0 %v80
    %1600 = vmatprep.subr.mxu0 %v85
    %1601 = vmatpush1.msra.mxu0 %v84
    %1602 = vmatprep.subr.mxu0 %v89
    %1603 = vmatpush1.msra.mxu0 %v88
    %1604 = vmatprep.subr.mxu0 %v93
    %1605 = vmatpush1.msra.mxu0 %v92
    %1606 = vmatprep.subr.mxu0 %v97
    %1607 = vmatpush1.msra.mxu0 %v96
    %1608 = vmatprep.subr.mxu0 0.0
    %1609 = vmatpush1.msra.mxu0 0.0
    %1610 = vmatprep.subr.mxu0 0.0
    %1611 = vmatpush1.msra.mxu0 0.0
    %1612 = vmatprep.subr.mxu0 0.0
    %1613 = vmatpush1.msra.mxu0 0.0
    %1614 = vmatprep.subr.mxu0 0.0
    %1615 = vmatpush1.msra.mxu0 0.0
    %1616 = vmatprep.subr.mxu0 0.0
    %1617 = vmatpush1.msra.mxu0 0.0
    %1618 = vmatprep.subr.mxu0 0.0
    %1619 = vmatpush1.msra.mxu0 0.0
    %1620 = vmatprep.subr.mxu0 0.0
    %1621 = vmatpush1.msra.mxu0 0.0
    %1622 = vmatprep.subr.mxu0 0.0
    %1623 = vmatpush1.msra.mxu0 0.0
    %1624 = vmatprep.subr.mxu0 0.0
    %1625 = vmatpush1.msra.mxu0 0.0
    %1626 = vmatprep.subr.mxu0 0.0
    %1627 = vmatpush1.msra.mxu0 0.0
    %1628 = vmatprep.subr.mxu0 0.0
    %1629 = vmatpush1.msra.mxu0 0.0
    %1630 = vmatprep.subr.mxu0 0.0
    %1631 = vmatpush1.msra.mxu0 0.0
    %1632 = vmatprep.subr.mxu0 0.0
    %1633 = vmatpush1.msra.mxu0 0.0
    %1634 = vmatprep.subr.mxu0 0.0
    %1635 = vmatpush1.msra.mxu0 0.0
    %1636 = vmatprep.subr.mxu0 0.0
    %1637 = vmatpush1.msra.mxu0 0.0
    %1638 = vmatprep.subr.mxu0 0.0
    %1639 = vmatpush1.msra.mxu0 0.0
    %1640 = vmatprep.mubr.f32.mxu0 0.0
    %1641 = vmatmul.mubr.f32.gmra.mrb[0].mxu0 %v1504
    %v1642 = vpop.f32.mrb[0].mxu0
    %v1643 = vadd.f32 0.0, %v1642
    %v1644 = vpop.f32.mrb[0].mxu0
    %v1645 = vadd.f32 0.0, %v1644
    %1646 = vdwg.mxu0
    %v1647 = vadd.f32 %v1500, %v1572
    %v1648 = vadd.f32 %v1501, %v1574
    %v1649 = vadd.f32 %v1502, %v1643
    %v1650 = vadd.f32 %v1503, %v1645
    %v1651 = vxor.u32 %v1647, 2147483648
    %v1652 = vxor.u32 %v1648, 2147483648
    %v1653 = vxor.u32 %v1649, 2147483648
    %v1654 = vmul.f32 %v1651, 1.442695
    %v1655 = vpow.pop %v1654
    %v1656 = vmul.f32 %v1652, 1.442695
    %v1657 = vpow.pop %v1656
    %v1658 = vmul.f32 %v1653, 1.442695
    %v1659 = vpow.pop %v1658
    %v1660 = vadd.f32 %v1655, 1.0
    %v1661 = vadd.f32 %v1657, 1.0
    %v1662 = vadd.f32 %v1659, 1.0
    %v1663 = vrcp.pop %v1660
    %v1664 = vmul.f32 1.0, %v1663
    %v1665 = vrcp.pop %v1661
    %v1666 = vmul.f32 1.0, %v1665
    %v1667 = vrcp.pop %v1662
    %v1668 = vmul.f32 1.0, %v1667
    %v1669 = vtanh.pop %v1650
    %v1670 = vld [vmem:[#allocation4] sm:$0xff]
    %v1671 = vmul.f32 %v1666, %v1670
    %v1672 = vmul.f32 %v1664, %v1669
    %v1673 = vadd.f32 %v1671, %v1672
    %1674 = vst [vmem:[#allocation4] sm:$0xff] %v1673
    %v1675 = vtanh.pop %v1673
    %v1676 = vmul.f32 %v1668, %v1675
    %1677 = vst [vmem:[#allocation3] sm:$0xff] %v1676
    %s1678 = scalar_lea.vmem [#allocation2], 224
    %v1679 = vld [vmem:[%s1678] sm:$0xff]
    %v1680 = vld [vmem:[%s1678 + $0x8] sm:$0xff]
    %v1681 = vld [vmem:[%s1678 + $0x10] sm:$0xff]
    %v1682 = vld [vmem:[%s1678 + $0x18] sm:$0xff]
    %v1683 = vld [vmem:[#allocation3] sm:$0xff]
    %1684 = vmatprep.subr.mxu0 %v35
    %1685 = vmatpush1.msra.mxu0 %v34
    %1686 = vmatprep.subr.mxu0 %v39
    %1687 = vmatpush1.msra.mxu0 %v38
    %1688 = vmatprep.subr.mxu0 %v43
    %1689 = vmatpush1.msra.mxu0 %v42
    %1690 = vmatprep.subr.mxu0 %v47
    %1691 = vmatpush1.msra.mxu0 %v46
    %1692 = vmatprep.subr.mxu0 %v51
    %1693 = vmatpush1.msra.mxu0 %v50
    %1694 = vmatprep.subr.mxu0 %v55
    %1695 = vmatpush1.msra.mxu0 %v54
    %1696 = vmatprep.subr.mxu0 %v59
    %1697 = vmatpush1.msra.mxu0 %v58
    %1698 = vmatprep.subr.mxu0 %v63
    %1699 = vmatpush1.msra.mxu0 %v62
    %1700 = vmatprep.subr.mxu0 %v67
    %1701 = vmatpush1.msra.mxu0 %v66
    %1702 = vmatprep.subr.mxu0 %v71
    %1703 = vmatpush1.msra.mxu0 %v70
    %1704 = vmatprep.subr.mxu0 %v75
    %1705 = vmatpush1.msra.mxu0 %v74
    %1706 = vmatprep.subr.mxu0 %v79
    %1707 = vmatpush1.msra.mxu0 %v78
    %1708 = vmatprep.subr.mxu0 %v83
    %1709 = vmatpush1.msra.mxu0 %v82
    %1710 = vmatprep.subr.mxu0 %v87
    %1711 = vmatpush1.msra.mxu0 %v86
    %1712 = vmatprep.subr.mxu0 %v91
    %1713 = vmatpush1.msra.mxu0 %v90
    %1714 = vmatprep.subr.mxu0 %v95
    %1715 = vmatpush1.msra.mxu0 %v94
    %1716 = vmatprep.subr.mxu0 0.0
    %1717 = vmatpush1.msra.mxu0 0.0
    %1718 = vmatprep.subr.mxu0 0.0
    %1719 = vmatpush1.msra.mxu0 0.0
    %1720 = vmatprep.subr.mxu0 0.0
    %1721 = vmatpush1.msra.mxu0 0.0
    %1722 = vmatprep.subr.mxu0 0.0
    %1723 = vmatpush1.msra.mxu0 0.0
    %1724 = vmatprep.subr.mxu0 0.0
    %1725 = vmatpush1.msra.mxu0 0.0
    %1726 = vmatprep.subr.mxu0 0.0
    %1727 = vmatpush1.msra.mxu0 0.0
    %1728 = vmatprep.subr.mxu0 0.0
    %1729 = vmatpush1.msra.mxu0 0.0
    %1730 = vmatprep.subr.mxu0 0.0
    %1731 = vmatpush1.msra.mxu0 0.0
    %1732 = vmatprep.subr.mxu0 0.0
    %1733 = vmatpush1.msra.mxu0 0.0
    %1734 = vmatprep.subr.mxu0 0.0
    %1735 = vmatpush1.msra.mxu0 0.0
    %1736 = vmatprep.subr.mxu0 0.0
    %1737 = vmatpush1.msra.mxu0 0.0
    %1738 = vmatprep.subr.mxu0 0.0
    %1739 = vmatpush1.msra.mxu0 0.0
    %1740 = vmatprep.subr.mxu0 0.0
    %1741 = vmatpush1.msra.mxu0 0.0
    %1742 = vmatprep.subr.mxu0 0.0
    %1743 = vmatpush1.msra.mxu0 0.0
    %1744 = vmatprep.subr.mxu0 0.0
    %1745 = vmatpush1.msra.mxu0 0.0
    %1746 = vmatprep.subr.mxu0 0.0
    %1747 = vmatpush1.msra.mxu0 0.0
    %1748 = vmatprep.mubr.f32.mxu0 0.0
    %1749 = vmatmul.mubr.f32.gmra.mrb[0].mxu0 %v1683
    %v1750 = vpop.f32.mrb[0].mxu0
    %v1751 = vadd.f32 0.0, %v1750
    %v1752 = vpop.f32.mrb[0].mxu0
    %v1753 = vadd.f32 0.0, %v1752
    %1754 = vdwg.mxu0
    %1755 = vmatprep.subr.mxu0 %v37
    %1756 = vmatpush1.msra.mxu0 %v36
    %1757 = vmatprep.subr.mxu0 %v41
    %1758 = vmatpush1.msra.mxu0 %v40
    %1759 = vmatprep.subr.mxu0 %v45
    %1760 = vmatpush1.msra.mxu0 %v44
    %1761 = vmatprep.subr.mxu0 %v49
    %1762 = vmatpush1.msra.mxu0 %v48
    %1763 = vmatprep.subr.mxu0 %v53
    %1764 = vmatpush1.msra.mxu0 %v52
    %1765 = vmatprep.subr.mxu0 %v57
    %1766 = vmatpush1.msra.mxu0 %v56
    %1767 = vmatprep.subr.mxu0 %v61
    %1768 = vmatpush1.msra.mxu0 %v60
    %1769 = vmatprep.subr.mxu0 %v65
    %1770 = vmatpush1.msra.mxu0 %v64
    %1771 = vmatprep.subr.mxu0 %v69
    %1772 = vmatpush1.msra.mxu0 %v68
    %1773 = vmatprep.subr.mxu0 %v73
    %1774 = vmatpush1.msra.mxu0 %v72
    %1775 = vmatprep.subr.mxu0 %v77
    %1776 = vmatpush1.msra.mxu0 %v76
    %1777 = vmatprep.subr.mxu0 %v81
    %1778 = vmatpush1.msra.mxu0 %v80
    %1779 = vmatprep.subr.mxu0 %v85
    %1780 = vmatpush1.msra.mxu0 %v84
    %1781 = vmatprep.subr.mxu0 %v89
    %1782 = vmatpush1.msra.mxu0 %v88
    %1783 = vmatprep.subr.mxu0 %v93
    %1784 = vmatpush1.msra.mxu0 %v92
    %1785 = vmatprep.subr.mxu0 %v97
    %1786 = vmatpush1.msra.mxu0 %v96
    %1787 = vmatprep.subr.mxu0 0.0
    %1788 = vmatpush1.msra.mxu0 0.0
    %1789 = vmatprep.subr.mxu0 0.0
    %1790 = vmatpush1.msra.mxu0 0.0
    %1791 = vmatprep.subr.mxu0 0.0
    %1792 = vmatpush1.msra.mxu0 0.0
    %1793 = vmatprep.subr.mxu0 0.0
    %1794 = vmatpush1.msra.mxu0 0.0
    %1795 = vmatprep.subr.mxu0 0.0
    %1796 = vmatpush1.msra.mxu0 0.0
    %1797 = vmatprep.subr.mxu0 0.0
    %1798 = vmatpush1.msra.mxu0 0.0
    %1799 = vmatprep.subr.mxu0 0.0
    %1800 = vmatpush1.msra.mxu0 0.0
    %1801 = vmatprep.subr.mxu0 0.0
    %1802 = vmatpush1.msra.mxu0 0.0
    %1803 = vmatprep.subr.mxu0 0.0
    %1804 = vmatpush1.msra.mxu0 0.0
    %1805 = vmatprep.subr.mxu0 0.0
    %1806 = vmatpush1.msra.mxu0 0.0
    %1807 = vmatprep.subr.mxu0 0.0
    %1808 = vmatpush1.msra.mxu0 0.0
    %1809 = vmatprep.subr.mxu0 0.0
    %1810 = vmatpush1.msra.mxu0 0.0
    %1811 = vmatprep.subr.mxu0 0.0
    %1812 = vmatpush1.msra.mxu0 0.0
    %1813 = vmatprep.subr.mxu0 0.0
    %1814 = vmatpush1.msra.mxu0 0.0
    %1815 = vmatprep.subr.mxu0 0.0
    %1816 = vmatpush1.msra.mxu0 0.0
    %1817 = vmatprep.subr.mxu0 0.0
    %1818 = vmatpush1.msra.mxu0 0.0
    %1819 = vmatprep.mubr.f32.mxu0 0.0
    %1820 = vmatmul.mubr.f32.gmra.mrb[0].mxu0 %v1683
    %v1821 = vpop.f32.mrb[0].mxu0
    %v1822 = vadd.f32 0.0, %v1821
    %v1823 = vpop.f32.mrb[0].mxu0
    %v1824 = vadd.f32 0.0, %v1823
    %1825 = vdwg.mxu0
    %v1826 = vadd.f32 %v1679, %v1751
    %v1827 = vadd.f32 %v1680, %v1753
    %v1828 = vadd.f32 %v1681, %v1822
    %v1829 = vadd.f32 %v1682, %v1824
    %v1830 = vxor.u32 %v1826, 2147483648
    %v1831 = vxor.u32 %v1827, 2147483648
    %v1832 = vxor.u32 %v1828, 2147483648
    %v1833 = vmul.f32 %v1830, 1.442695
    %v1834 = vpow.pop %v1833
    %v1835 = vmul.f32 %v1831, 1.442695
    %v1836 = vpow.pop %v1835
    %v1837 = vmul.f32 %v1832, 1.442695
    %v1838 = vpow.pop %v1837
    %v1839 = vadd.f32 %v1834, 1.0
    %v1840 = vadd.f32 %v1836, 1.0
    %v1841 = vadd.f32 %v1838, 1.0
    %v1842 = vrcp.pop %v1839
    %v1843 = vmul.f32 1.0, %v1842
    %v1844 = vrcp.pop %v1840
    %v1845 = vmul.f32 1.0, %v1844
    %v1846 = vrcp.pop %v1841
    %v1847 = vmul.f32 1.0, %v1846
    %v1848 = vtanh.pop %v1829
    %v1849 = vld [vmem:[#allocation4] sm:$0xff]
    %v1850 = vmul.f32 %v1845, %v1849
    %v1851 = vmul.f32 %v1843, %v1848
    %v1852 = vadd.f32 %v1850, %v1851
    %1853 = vst [vmem:[#allocation4] sm:$0xff] %v1852
    %v1854 = vtanh.pop %v1852
    %v1855 = vmul.f32 %v1847, %v1854
    %1856 = vst [vmem:[#allocation3] sm:$0xff] %v1855
    %v1857 = vld [vmem:[#allocation3] sm:$0xff]
    %1858 = vst [vmem:[#allocation8] sm:$0xff] %v1857
    // Predicated region
    $region22: #{tpu_custom_call.1} parent=1 // pred_check
      _
    $region23: #{tpu_custom_call.1} parent=1 // pred_check_branch
      %1860 = sbr.rel (0) target = $region25
    $region24: #{tpu_custom_call.1} parent=1 // pred_region
      %s1862 = ssub.s32 128, 128
      %1863 = vsyncadd [#allocation7], %s1862
      %s1865 = sshll.u32 [#allocation8], 4
      %s1866 = int_to_ptr.vmem [resolvable:$true] %s1865
      %1868 = dma.vmem_to_hbm [thread:$0]  %s1866, 128, %s4, [#allocation7]
    $region25: #{tpu_custom_call.1} parent=1 // pred_fallthru
      _
    // Predicated region
    $region26: #{tpu_custom_call.1} parent=1 // pred_check
      _
    $region27: #{tpu_custom_call.1} parent=1 // pred_check_branch
      %1870 = sbr.rel (0) target = $region29
    $region28: #{tpu_custom_call.1} parent=1 // pred_region
      %1871 = dma.done [#allocation7], 128
    $region29: #{tpu_custom_call.1} parent=1 // pred_fallthru
      _
    %1872 = vsyncpa [#allocation6], 1
    %1873 = vsyncpa [#allocation7], 1

</llo_original>
